<compile_context>
chip_gen: v7x
topology: tpu7x:2x2x1
jax: 0.10.0
libtpu: 0.0.40
codegen_flags: <defaults>
</compile_context>

<pallas_src>
import jax
import jax.numpy as jnp
from jax.experimental import pallas as pl
from jax.experimental.pallas import tpu as pltpu


def _round_up(x, m):
    return (x + m - 1) // m * m


def pos_embed_kernel(tok_ref, pos_ref, table_ref, scale_ref, out_ref):
    k = pl.program_id(1)                         # reduction axis over table slabs
    rows = out_ref.shape[0]
    ktile = table_ref.shape[0]
    base = k * ktile

    tok = tok_ref[0, :]                          # (rows,) int32 token ids
    pos = pos_ref[0, :]                          # (rows,) int32, already offset by +vocab
    iota = jax.lax.broadcasted_iota(jnp.int32, (rows, ktile), 1)
    s = scale_ref[0, 0]

    # Fused selector: `scale` at the token's table row, 1.0 at the position row.
    sel = (((tok[:, None] - base) == iota).astype(jnp.float32) * s
           + ((pos[:, None] - base) == iota).astype(jnp.float32))

    contrib = jnp.dot(sel, table_ref[...], preferred_element_type=jnp.float32)

    @pl.when(k == 0)
    def _():
        out_ref[...] = contrib

    @pl.when(k > 0)
    def _():
        out_ref[...] += contrib


def pos_embedding_forward(src_seq, embed_table, w_pos, b_pos, scale,
                          *, row_tile=256, k_tile=1024):
    """src_seq: (B, L) int; embed_table: (vocab, D);
    w_pos: (D, max_len+1)  (PyTorch nn.Linear weight layout); b_pos: (D,)."""
    B, L = src_seq.shape
    vocab, D = embed_table.shape
    max_len = w_pos.shape[1] - 1

    # Fused gather table: [embedding rows ; position rows (bias folded in)].
    pos_table = jnp.asarray(w_pos, jnp.float32).T + jnp.asarray(b_pos, jnp.float32)[None, :]
    table = jnp.concatenate([jnp.asarray(embed_table, jnp.float32), pos_table], axis=0)
    K = vocab + max_len + 1

    # Flatten batch*seq into one row axis.
    N = B * L
    tok_flat = jnp.asarray(src_seq, jnp.int32).reshape(-1)
    pos_flat = jnp.tile(vocab + jnp.clip(jnp.arange(L, dtype=jnp.int32), 0, max_len), B)

    # Tiling / padding.
    row_tile = min(row_tile, _round_up(N, 128))
    N_pad = _round_up(N, row_tile)
    k_tile = min(k_tile, _round_up(K, 128))
    K_pad = _round_up(K, k_tile)

    tok_p = jnp.pad(tok_flat, (0, N_pad - N)).reshape(1, N_pad)
    pos_p = jnp.pad(pos_flat, (0, N_pad - N), constant_values=vocab).reshape(1, N_pad)
    table_p = jnp.pad(table, ((0, K_pad - K), (0, 0)))
    scale2 = jnp.asarray(scale, jnp.float32).reshape(1, 1)

    grid = (N_pad // row_tile, K_pad // k_tile)

    # VMEM budget: double-buffered table / token / output blocks + headroom (clamped).
    vmem_bytes = 4 * 2 * (k_tile * D + row_tile * D + 4 * row_tile) + (2 << 20)
    vmem_bytes = int(min(max(vmem_bytes, 16 << 20), 48 << 20))

    out = pl.pallas_call(
        pos_embed_kernel,
        out_shape=jax.ShapeDtypeStruct((N_pad, D), jnp.float32),
        grid=grid,
        in_specs=[
            pl.BlockSpec((1, row_tile), lambda r, k: (0, r)),       # token ids
            pl.BlockSpec((1, row_tile), lambda r, k: (0, r)),       # shifted pos ids
            pl.BlockSpec((k_tile, D), lambda r, k: (k, 0)),         # fused table slab
            pl.BlockSpec(memory_space=pltpu.MemorySpace.SMEM),      # scalar scale
        ],
        out_specs=pl.BlockSpec((row_tile, D), lambda r, k: (r, 0)),
        compiler_params=pltpu.CompilerParams(
            dimension_semantics=("parallel", "arbitrary"),
            vmem_limit_bytes=vmem_bytes),
    )(tok_p, pos_p, table_p, scale2)

    return out[:N].reshape(B, L, D)


if __name__ == "__main__":
    key = jax.random.PRNGKey(0)
    B, L = 4, 384                               # multiple row tiles after flattening
    vocab, model_dim, max_len = 640, 128, 12    # L > max_len so clipping is exercised
    k1, k2, k3, k4 = jax.random.split(key, 4)

    # Deterministic synthetic parameters (shapes per nn.Embedding / nn.Linear).
    embed_table = jax.random.normal(k1, (vocab, model_dim), jnp.float32)
    w_pos = jax.random.normal(k2, (model_dim, max_len + 1), jnp.float32) * 0.1
    b_pos = jax.random.normal(k3, (model_dim,), jnp.float32) * 0.1
    scale = jnp.sqrt(jnp.float32(model_dim // 2))          # non-trainable buffer

    src_seq = jax.random.randint(k4, (B, L), 0, vocab, dtype=jnp.int32)

    # Pure-JAX reference (mirrors the PyTorch forward exactly).
    seq_embed = embed_table[src_seq] * scale                       # (B, L, D)
    pos_idx = jnp.clip(jnp.arange(L), 0, max_len)
    rel_oh = jax.nn.one_hot(pos_idx, max_len + 1, dtype=jnp.float32)
    pos_enc = rel_oh @ w_pos.T + b_pos                             # (L, D)
    ref = seq_embed + pos_enc[None, :, :]

    # 1) Small k_tile: exercises the k-reduction / accumulation path (3 k steps).
    out_a = pos_embedding_forward(src_seq, embed_table, w_pos, b_pos, scale,
                                  row_tile=256, k_tile=256)
    out_a = jax.block_until_ready(out_a)
    # 2) Default k_tile: single-k fast path (table resident once for the grid).
    out_b = pos_embedding_forward(src_seq, embed_table, w_pos, b_pos, scale)
    out_b = jax.block_until_ready(out_b)

    for out in (out_a, out_b):
        assert out.shape == (B, L, model_dim) and out.dtype == jnp.float32
        assert jnp.allclose(out, ref, atol=1e-4, rtol=1e-4), "mismatch vs reference"
    print("KERNEL_OK")
</pallas_src>

<mosaic_0001>
module attributes {stable_mosaic.version = 11 : i64} {
  func.func @pos_embed_kernel(%arg0: i32, %arg1: i32, %arg2: memref<1x256xi32, #tpu.memory_space<vmem>>, %arg3: memref<1x256xi32, #tpu.memory_space<vmem>>, %arg4: memref<256x128xf32, #tpu.memory_space<vmem>>, %arg5: memref<1x1xf32, #tpu.memory_space<smem>>, %arg6: memref<256x128xf32, #tpu.memory_space<vmem>>) attributes {dimension_semantics = [#tpu.dimension_semantics<parallel>, #tpu.dimension_semantics<arbitrary>], iteration_bounds = array<i64: 6, 3>, scalar_prefetch = 0 : i64, scratch_operands = 0 : i64, tpu.core_type = #tpu.core_type<tc>, window_params = [{transform_indices = @transform_0, window_bounds = array<i64: 1, 256>}, {transform_indices = @transform_1, window_bounds = array<i64: 1, 256>}, {transform_indices = @transform_2, window_bounds = array<i64: 256, 128>}, {transform_indices = @transform_3, window_bounds = array<i64: 1, 1>}, {transform_indices = @transform_4, window_bounds = array<i64: 256, 128>}]} {
    %c256_i32 = arith.constant 256 : i32
    %0 = arith.muli %arg1, %c256_i32 : i32
    %c0 = arith.constant 0 : index
    %c0_0 = arith.constant 0 : index
    %1 = vector.load %arg2[%c0, %c0_0] : memref<1x256xi32, #tpu.memory_space<vmem>>, vector<1x256xi32>
    %2 = vector.shape_cast %1 : vector<1x256xi32> to vector<256xi32>
    %c0_1 = arith.constant 0 : index
    %c0_2 = arith.constant 0 : index
    %3 = vector.load %arg3[%c0_1, %c0_2] : memref<1x256xi32, #tpu.memory_space<vmem>>, vector<1x256xi32>
    %4 = vector.shape_cast %3 : vector<1x256xi32> to vector<256xi32>
    %5 = tpu.iota {dimensions = array<i32: 1>} : vector<256x256xi32>
    %c0_3 = arith.constant 0 : index
    %c0_4 = arith.constant 0 : index
    %6 = memref.load %arg5[%c0_3, %c0_4] : memref<1x1xf32, #tpu.memory_space<smem>>
    %7 = vector.shape_cast %2 : vector<256xi32> to vector<256x1xi32>
    %8 = vector.broadcast %0 : i32 to vector<256x1xi32>
    %9 = arith.subi %7, %8 : vector<256x1xi32>
    %10 = vector.broadcast %9 : vector<256x1xi32> to vector<256x256xi32>
    %11 = arith.cmpi eq, %10, %5 : vector<256x256xi32>
    %12 = arith.extui %11 : vector<256x256xi1> to vector<256x256xi32>
    %13 = arith.sitofp %12 : vector<256x256xi32> to vector<256x256xf32>
    %14 = vector.broadcast %6 : f32 to vector<256x256xf32>
    %15 = arith.mulf %13, %14 : vector<256x256xf32>
    %16 = vector.shape_cast %4 : vector<256xi32> to vector<256x1xi32>
    %17 = vector.broadcast %0 : i32 to vector<256x1xi32>
    %18 = arith.subi %16, %17 : vector<256x1xi32>
    %19 = vector.broadcast %18 : vector<256x1xi32> to vector<256x256xi32>
    %20 = arith.cmpi eq, %19, %5 : vector<256x256xi32>
    %21 = arith.extui %20 : vector<256x256xi1> to vector<256x256xi32>
    %22 = arith.sitofp %21 : vector<256x256xi32> to vector<256x256xf32>
    %23 = arith.addf %15, %22 : vector<256x256xf32>
    %c0_5 = arith.constant 0 : index
    %c0_6 = arith.constant 0 : index
    %24 = vector.load %arg4[%c0_5, %c0_6] : memref<256x128xf32, #tpu.memory_space<vmem>>, vector<256x128xf32>
    %cst = arith.constant dense<0.000000e+00> : vector<256x128xf32>
    %25 = tpu.matmul %23, %24, %cst {dimension_numbers = #tpu.dot_dimension_numbers<[1], [0], [0], [1], [0, 0, 1, 1], [], []>} : vector<256x256xf32>, vector<256x128xf32>, vector<256x128xf32> -> vector<256x128xf32>
    %c0_i32 = arith.constant 0 : i32
    %26 = arith.cmpi eq, %arg1, %c0_i32 : i32
    %27 = arith.extui %26 : i1 to i32
    %c0_i32_7 = arith.constant 0 : i32
    %28 = arith.cmpi ne, %27, %c0_i32_7 : i32
    scf.if %28 {
      %c0_10 = arith.constant 0 : index
      %c0_11 = arith.constant 0 : index
      %32 = vector.load %arg6[%c0_10, %c0_11] : memref<256x128xf32, #tpu.memory_space<vmem>>, vector<256x128xf32>
      tpu.vector_store %arg6[%c0_10, %c0_11], %25 {strides = array<i32>} : memref<256x128xf32, #tpu.memory_space<vmem>>, vector<256x128xf32>,
    } else {
    }
    %c0_i32_8 = arith.constant 0 : i32
    %29 = arith.cmpi sgt, %arg1, %c0_i32_8 : i32
    %30 = arith.extui %29 : i1 to i32
    %c0_i32_9 = arith.constant 0 : i32
    %31 = arith.cmpi ne, %30, %c0_i32_9 : i32
    scf.if %31 {
      %c0_10 = arith.constant 0 : index
      %c0_11 = arith.constant 0 : index
      %32 = vector.load %arg6[%c0_10, %c0_11] : memref<256x128xf32, #tpu.memory_space<vmem>>, vector<256x128xf32>
      %33 = arith.addf %32, %25 : vector<256x128xf32>
      %c0_12 = arith.constant 0 : index
      %c0_13 = arith.constant 0 : index
      %34 = vector.load %arg6[%c0_12, %c0_13] : memref<256x128xf32, #tpu.memory_space<vmem>>, vector<256x128xf32>
      tpu.vector_store %arg6[%c0_12, %c0_13], %33 {strides = array<i32>} : memref<256x128xf32, #tpu.memory_space<vmem>>, vector<256x128xf32>,
    } else {
    }
    return
  }
  func.func @transform_0(%arg0: i32, %arg1: i32) -> (i32, i32) {
    %c0_i32 = arith.constant 0 : i32
    %c0_i32_0 = arith.constant 0 : i32
    return %c0_i32, %arg0 : i32, i32
  }
  func.func @transform_1(%arg0: i32, %arg1: i32) -> (i32, i32) {
    %c0_i32 = arith.constant 0 : i32
    %c0_i32_0 = arith.constant 0 : i32
    return %c0_i32, %arg0 : i32, i32
  }
  func.func @transform_2(%arg0: i32, %arg1: i32) -> (i32, i32) {
    %c0_i32 = arith.constant 0 : i32
    %c0_i32_0 = arith.constant 0 : i32
    return %arg1, %c0_i32 : i32, i32
  }
  func.func @transform_3(%arg0: i32, %arg1: i32) -> (i32, i32) {
    %c0_i32 = arith.constant 0 : i32
    %c0_i32_0 = arith.constant 0 : i32
    %c0_i32_1 = arith.constant 0 : i32
    return %c0_i32, %c0_i32_0 : i32, i32
  }
  func.func @transform_4(%arg0: i32, %arg1: i32) -> (i32, i32) {
    %c0_i32 = arith.constant 0 : i32
    %c0_i32_0 = arith.constant 0 : i32
    return %arg0, %c0_i32 : i32, i32
  }
}

</mosaic_0001>

<llo_original>
// kernel: tpu_custom_call.1
$region0: #{tpu_custom_call.1}
  #allocation0 [shape = 'u32[]', space=smem, size = 0x4, offset = 0x4, fixed_abs, tag = 'smem constant byte address 0x4 - core index']
  #allocation1 [shape = 'u32[144,128]{1,0:T(1,128)}', space=vmem, size = 0x12000, scoped, tag = 'internal scratch']
  #allocation2 [shape = 'f32[1,1]{1,0:T(1,128)S(6)}', space=smem, size = 0x200, scoped, tag = 'scoped memory for tpu_custom_call.1']
  %s0 = inlined_call_operand.hbm [shape: s32[1,1536], index: 0, kind: input, shape index: {}]
  %s1 = inlined_call_operand.hbm [shape: s32[1,1536], index: 1, kind: input, shape index: {}]
  %s2 = inlined_call_operand.hbm [shape: f32[768,128], index: 2, kind: input, shape index: {}]
  %s3 = inlined_call_operand.<no memory space> [shape: f32[1,1], index: 3, kind: input, shape index: {}]
  %s4 = inlined_call_operand.hbm [shape: f32[1536,128], index: 4, kind: output, shape index: {}]
  %s5 = sld [smem:[#allocation0]]
  $region69: #{tpu_custom_call.1} parent=0
    _
  %s7 = ssub.s32 1, %s5
  %s8 = scalar_select 0, %s7, %s5
  %9 = sst [smem:[#allocation2]] %s3
  $region1: #{tpu_custom_call.1} parent=0
    #allocation3 [shape = 'u8[2048]{0}', space=vmem, size = 0x800, scoped, tag = 'input window, operand 0']
    #allocation4 [shape = 's32[2]{0}', space=sflag, size = 0x8, scoped, tag = 'scoped memory for tpu_custom_call.1']
    #allocation5 [shape = 's32[2]{0}', space=sflag, size = 0x8, scoped, tag = 'scoped memory for tpu_custom_call.1']
    #allocation6 [shape = 'u8[2048]{0}', space=vmem, size = 0x800, scoped, tag = 'input window, operand 1']
    #allocation7 [shape = 's32[2]{0}', space=sflag, size = 0x8, scoped, tag = 'scoped memory for tpu_custom_call.1']
    #allocation8 [shape = 'u8[262144]{0}', space=vmem, size = 0x40000, scoped, tag = 'input window, operand 2']
    #allocation9 [shape = 'u8[262144]{0}', space=vmem, size = 0x40000, scoped, tag = 'output window, operand 0']
    %10 = vsyncpa [#allocation4], 0
    %s11 = scalar_lea.sflag [#allocation4], 1
    %12 = vsyncpa %s11, 0
    %13 = vsyncpa [#allocation7], 0
    %s14 = scalar_lea.sflag [#allocation7], 1
    %15 = vsyncpa %s14, 0
    %16 = vsyncpa [#allocation5], 0
    %s17 = scalar_lea.sflag [#allocation5], 1
    %18 = vsyncpa %s17, 0
    loop: start=0, step=1, limit=20
    $region2: #{tpu_custom_call.1} parent=1 // loop_pre_header
      _
    $region3: #{tpu_custom_call.1} parent=1 // loop_header
      %s20 = sphi 0, %s24
      %p21 = scmp.ge.s32.totalorder %s20, 20
      %s27 = sphi 0, %s39
      %s28 = sphi 0, %s35
      %s29 = sphi 0, %s27
      %s30 = sphi 0, %s28
      %s31 = sphi 0, %s29
      %s32 = sphi 0, %s30
      %s42 = sphi 0, %s44
      %s45 = sphi 0, %s42
      %s46 = sphi 0, %s45
      %s62 = sphi 0, %s46
      %s68 = sphi 0, %s70
      %s71 = sphi 0, %s68
      %s72 = sphi 0, %s71
      %s88 = sphi 0, %s72
      %s94 = sphi 0, %s96
      %s97 = sphi 0, %s94
      %s98 = sphi 0, %s97
      %s114 = sphi 0, %s98
      %s118 = sphi 0, %s118
      %s120 = sphi 0, %s118
      %s121 = sphi 0, %s120
      %s135 = sphi 0, %s121
      %s141 = sphi 0, %s143
      %s144 = sphi 0, %s141
      %s145 = sphi 0, %s144
      %s161 = sphi 0, %s145
    $region4: #{tpu_custom_call.1} parent=1 // loop_header_branch
      %23 = sbr.rel (%p21) target = $region8
    $region5: #{tpu_custom_call.1} parent=1 // loop_body
      %s25 = ssub.s32 %s20, 1
      %s26 = ssub.s32 %s20, 2
      %s33 = sadd.s32 1, %s28
      %p34 = scmp.ge.s32.totalorder %s33, 3
      %s35 = scalar_select %p34, 0, %s33
      %s36 = sadd.s32 1, %s27
      %s37 = scalar_select %p34, %s36, %s27
      %p38 = scmp.ge.s32.totalorder %s37, 6
      %s39 = scalar_select %p38, 0, %s37
      %s40 = ssub.s32 %s27, %s39
      %p41 = scmp.eq.s32.totalorder %s40, 0
      %s43 = sadd.s32 %s42, 1
      %s44 = scalar_select %p41, %s42, %s43
      %p47 = pneg %p41
      %p48 = scmp.eq.s32.totalorder %s20, 17
      %p49 = por %p47, %p48
      %p50 = scmp.ne.s32.totalorder %s42, %s45
      %p51 = scmp.eq.s32.totalorder %s20, 0
      %p52 = por %p50, %p51
      %p53 = scmp.ne.s32.totalorder %s42, %s45
      %p54 = scmp.eq.s32.totalorder %s25, 17
      %p55 = por %p53, %p54
      %p56 = scmp.ne.s32.totalorder %s45, %s46
      %p57 = scmp.eq.s32.totalorder %s25, 0
      %p58 = por %p56, %p57
      %p59 = scmp.ne.s32.totalorder %s45, %s46
      %p60 = scmp.eq.s32.totalorder %s26, 17
      %p61 = por %p59, %p60
      %p63 = scmp.ne.s32.totalorder %s46, %s62
      %p64 = scmp.eq.s32.totalorder %s26, 0
      %p65 = por %p63, %p64
      %s66 = ssub.s32 %s27, %s39
      %p67 = scmp.eq.s32.totalorder %s66, 0
      %s69 = sadd.s32 %s68, 1
      %s70 = scalar_select %p67, %s68, %s69
      %p73 = pneg %p67
      %p74 = scmp.eq.s32.totalorder %s20, 17
      %p75 = por %p73, %p74
      %p76 = scmp.ne.s32.totalorder %s68, %s71
      %p77 = scmp.eq.s32.totalorder %s20, 0
      %p78 = por %p76, %p77
      %p79 = scmp.ne.s32.totalorder %s68, %s71
      %p80 = scmp.eq.s32.totalorder %s25, 17
      %p81 = por %p79, %p80
      %p82 = scmp.ne.s32.totalorder %s71, %s72
      %p83 = scmp.eq.s32.totalorder %s25, 0
      %p84 = por %p82, %p83
      %p85 = scmp.ne.s32.totalorder %s71, %s72
      %p86 = scmp.eq.s32.totalorder %s26, 17
      %p87 = por %p85, %p86
      %p89 = scmp.ne.s32.totalorder %s72, %s88
      %p90 = scmp.eq.s32.totalorder %s26, 0
      %p91 = por %p89, %p90
      %s92 = ssub.s32 %s28, %s35
      %p93 = scmp.eq.s32.totalorder %s92, 0
      %s95 = sadd.s32 %s94, 1
      %s96 = scalar_select %p93, %s94, %s95
      %p99 = pneg %p93
      %p100 = scmp.eq.s32.totalorder %s20, 17
      %p101 = por %p99, %p100
      %p102 = scmp.ne.s32.totalorder %s94, %s97
      %p103 = scmp.eq.s32.totalorder %s20, 0
      %p104 = por %p102, %p103
      %p105 = scmp.ne.s32.totalorder %s94, %s97
      %p106 = scmp.eq.s32.totalorder %s25, 17
      %p107 = por %p105, %p106
      %p108 = scmp.ne.s32.totalorder %s97, %s98
      %p109 = scmp.eq.s32.totalorder %s25, 0
      %p110 = por %p108, %p109
      %p111 = scmp.ne.s32.totalorder %s97, %s98
      %p112 = scmp.eq.s32.totalorder %s26, 17
      %p113 = por %p111, %p112
      %p115 = scmp.ne.s32.totalorder %s98, %s114
      %p116 = scmp.eq.s32.totalorder %s26, 0
      %p117 = por %p115, %p116
      %s119 = sadd.s32 %s118, 1
      %p122 = scmp.eq.s32.totalorder %s20, 17
      %p123 = scmp.ne.s32.totalorder %s118, %s120
      %p124 = scmp.eq.s32.totalorder %s20, 0
      %p125 = por %p123, %p124
      %p126 = scmp.ne.s32.totalorder %s118, %s120
      %p127 = scmp.eq.s32.totalorder %s25, 17
      %p128 = por %p126, %p127
      %p129 = scmp.ne.s32.totalorder %s120, %s121
      %p130 = scmp.eq.s32.totalorder %s25, 0
      %p131 = por %p129, %p130
      %p132 = scmp.ne.s32.totalorder %s120, %s121
      %p133 = scmp.eq.s32.totalorder %s26, 17
      %p134 = por %p132, %p133
      %p136 = scmp.ne.s32.totalorder %s121, %s135
      %p137 = scmp.eq.s32.totalorder %s26, 0
      %p138 = por %p136, %p137
      %s139 = ssub.s32 %s27, %s39
      %p140 = scmp.eq.s32.totalorder %s139, 0
      %s142 = sadd.s32 %s141, 1
      %s143 = scalar_select %p140, %s141, %s142
      %p146 = pneg %p140
      %p147 = scmp.eq.s32.totalorder %s20, 17
      %p148 = por %p146, %p147
      %p149 = scmp.ne.s32.totalorder %s141, %s144
      %p150 = scmp.eq.s32.totalorder %s20, 0
      %p151 = por %p149, %p150
      %p152 = scmp.ne.s32.totalorder %s141, %s144
      %p153 = scmp.eq.s32.totalorder %s25, 17
      %p154 = por %p152, %p153
      %p155 = scmp.ne.s32.totalorder %s144, %s145
      %p156 = scmp.eq.s32.totalorder %s25, 0
      %p157 = por %p155, %p156
      %p158 = scmp.ne.s32.totalorder %s144, %s145
      %p159 = scmp.eq.s32.totalorder %s26, 17
      %p160 = por %p158, %p159
      %p162 = scmp.ne.s32.totalorder %s145, %s161
      %p163 = scmp.eq.s32.totalorder %s26, 0
      %p164 = por %p162, %p163
      %p165 = scmp.le.s32.totalorder 1, %s20
      %p166 = scmp.lt.s32.totalorder %s20, 19
      %p167 = pnand %p165, %p166
      %p168 = pneg %p167
      // Predicated region
      $region9: #{tpu_custom_call.1} parent=5 // pred_check
        _
      $region10: #{tpu_custom_call.1} parent=5 // pred_check_branch
        %170 = sbr.rel (%p167) target = $region12
      $region11: #{tpu_custom_call.1} parent=5 // pred_region
        %s171 = ssub.s32 %s20, 1
        // Predicated region
        $region13: #{tpu_custom_call.1} parent=11 // pred_check
          %p172 = pneg %p131
        $region14: #{tpu_custom_call.1} parent=11 // pred_check_branch
          %174 = sbr.rel (%p172) target = $region16
        $region15: #{tpu_custom_call.1} parent=11 // pred_region
          _
        $region16: #{tpu_custom_call.1} parent=11 // pred_fallthru
          _
      $region12: #{tpu_custom_call.1} parent=5 // pred_fallthru
        _
      %p175 = scmp.lt.s32.totalorder %s20, 18
      // Predicated region
      $region17: #{tpu_custom_call.1} parent=5 // pred_check
        %p176 = pneg %p175
      $region18: #{tpu_custom_call.1} parent=5 // pred_check_branch
        %178 = sbr.rel (%p176) target = $region20
      $region19: #{tpu_custom_call.1} parent=5 // pred_region
        // Predicated region
        $region21: #{tpu_custom_call.1} parent=19 // pred_check
          %p179 = pneg %p52
        $region22: #{tpu_custom_call.1} parent=19 // pred_check_branch
          %181 = sbr.rel (%p179) target = $region24
        $region23: #{tpu_custom_call.1} parent=19 // pred_region
          %s182 = sand.u32 %s42, 1
          %s183 = scalar_lea.sflag [#allocation4], %s182
          %s184 = sand.u32 %s42, 1
          %s185 = smul.addr %s184, 2
          %s186 = scalar_lea.vmem [#allocation3], %s185
          %s187 = smul.u32 2, %s27
          %s189 = ssub.s32 32, 32
          %190 = vsyncadd %s183, %s189
          %s191 = smul.addr %s187, 16
          %s192 = scalar_lea.hbm %s0, %s191
          %s194 = sshll.u32 %s186, 4
          %s195 = int_to_ptr.vmem [resolvable:$true] %s194
          %197 = dma.hbm_to_vmem [thread:$0]  %s192, 32, %s195, %s183
        $region24: #{tpu_custom_call.1} parent=19 // pred_fallthru
          _
        // Predicated region
        $region25: #{tpu_custom_call.1} parent=19 // pred_check
          %p198 = pneg %p78
        $region26: #{tpu_custom_call.1} parent=19 // pred_check_branch
          %200 = sbr.rel (%p198) target = $region28
        $region27: #{tpu_custom_call.1} parent=19 // pred_region
          %s201 = sand.u32 %s20, 1
          %s202 = scalar_lea.sflag [#allocation7], %s201
          %s203 = sand.u32 %s68, 1
          %s204 = smul.addr %s203, 2
          %s205 = scalar_lea.vmem [#allocation6], %s204
          %s206 = smul.u32 2, %s27
          %s208 = ssub.s32 32, 32
          %209 = vsyncadd %s202, %s208
          %s210 = smul.addr %s206, 16
          %s211 = scalar_lea.hbm %s1, %s210
          %s213 = sshll.u32 %s205, 4
          %s214 = int_to_ptr.vmem [resolvable:$true] %s213
          %216 = dma.hbm_to_vmem [thread:$0]  %s211, 32, %s214, %s202
        $region28: #{tpu_custom_call.1} parent=19 // pred_fallthru
          _
        // Predicated region
        $region29: #{tpu_custom_call.1} parent=19 // pred_check
          %p217 = pneg %p104
        $region30: #{tpu_custom_call.1} parent=19 // pred_check_branch
          %219 = sbr.rel (%p217) target = $region32
        $region31: #{tpu_custom_call.1} parent=19 // pred_region
          %s220 = sand.u32 %s20, 1
          %s221 = scalar_lea.sflag [#allocation7], %s220
          %s222 = sand.u32 %s94, 1
          %s223 = smul.addr %s222, 256
          %s224 = scalar_lea.vmem [#allocation8], %s223
          %s225 = smul.u32 32, %s28
          %s227 = ssub.s32 4096, 4096
          %228 = vsyncadd %s221, %s227
          %s229 = smul.addr %s225, 128
          %s230 = scalar_lea.hbm %s2, %s229
          %s231 = sshll.u32 %s224, 4
          %s232 = int_to_ptr.vmem [resolvable:$true] %s231
          %237 = dma.hbm_to_vmem [thread:$0]  %s230, 4096, %s232, %s221, 128, 128, 8
        $region32: #{tpu_custom_call.1} parent=19 // pred_fallthru
          _
      $region20: #{tpu_custom_call.1} parent=5 // pred_fallthru
        _
      %p238 = scmp.le.s32.totalorder 1, %s20
      %p239 = scmp.lt.s32.totalorder %s20, 19
      %p240 = pnand %p238, %p239
      %p241 = pneg %p240
      // Predicated region
      $region33: #{tpu_custom_call.1} parent=5 // pred_check
        _
      $region34: #{tpu_custom_call.1} parent=5 // pred_check_branch
        %243 = sbr.rel (%p240) target = $region36
      $region35: #{tpu_custom_call.1} parent=5 // pred_region
        %s244 = ssub.s32 %s20, 1
        %s245 = sand.u32 %s45, 1
        %s246 = scalar_lea.sflag [#allocation4], %s245
        %s247 = sand.u32 %s45, 1
        %s248 = smul.addr %s247, 2
        %s249 = scalar_lea.vmem [#allocation3], %s248
        // Predicated region
        $region37: #{tpu_custom_call.1} parent=35 // pred_check
          %p250 = pneg %p58
        $region38: #{tpu_custom_call.1} parent=35 // pred_check_branch
          %252 = sbr.rel (%p250) target = $region40
        $region39: #{tpu_custom_call.1} parent=35 // pred_region
          %253 = dma.done %s246, 32
        $region40: #{tpu_custom_call.1} parent=35 // pred_fallthru
          _
        %s254 = sand.u32 %s25, 1
        %s255 = scalar_lea.sflag [#allocation7], %s254
        %s256 = sand.u32 %s71, 1
        %s257 = smul.addr %s256, 2
        %s258 = scalar_lea.vmem [#allocation6], %s257
        // Predicated region
        $region41: #{tpu_custom_call.1} parent=35 // pred_check
          %p259 = pneg %p84
        $region42: #{tpu_custom_call.1} parent=35 // pred_check_branch
          %261 = sbr.rel (%p259) target = $region44
        $region43: #{tpu_custom_call.1} parent=35 // pred_region
          %262 = dma.done %s255, 32
        $region44: #{tpu_custom_call.1} parent=35 // pred_fallthru
          _
        %s263 = sand.u32 %s25, 1
        %s264 = scalar_lea.sflag [#allocation7], %s263
        %s265 = sand.u32 %s97, 1
        %s266 = smul.addr %s265, 256
        %s267 = scalar_lea.vmem [#allocation8], %s266
        // Predicated region
        $region45: #{tpu_custom_call.1} parent=35 // pred_check
          %p268 = pneg %p110
        $region46: #{tpu_custom_call.1} parent=35 // pred_check_branch
          %270 = sbr.rel (%p268) target = $region48
        $region47: #{tpu_custom_call.1} parent=35 // pred_region
          %271 = dma.done %s264, 4096
        $region48: #{tpu_custom_call.1} parent=35 // pred_fallthru
          _
        %s272 = sand.u32 %s45, 1
        %s273 = scalar_lea.sflag [#allocation4], %s272
        %s274 = sand.u32 %s45, 1
        %s275 = smul.addr %s274, 2
        %s276 = scalar_lea.vmem [#allocation3], %s275
        %p277 = pneg %p58
        %p278 = pneg %p55
        %s279 = sand.u32 %s25, 1
        %s280 = scalar_lea.sflag [#allocation7], %s279
        %s281 = sand.u32 %s71, 1
        %s282 = smul.addr %s281, 2
        %s283 = scalar_lea.vmem [#allocation6], %s282
        %p284 = pneg %p84
        %p285 = pneg %p81
        %s286 = sand.u32 %s25, 1
        %s287 = scalar_lea.sflag [#allocation7], %s286
        %s288 = sand.u32 %s97, 1
        %s289 = smul.addr %s288, 256
        %s290 = scalar_lea.vmem [#allocation8], %s289
        %p291 = pneg %p110
        %p292 = pneg %p107
        %p293 = pneg %p131
        %p294 = pneg %p128
        %p295 = pneg %p157
        %p296 = pneg %p154
        %s297 = sand.u32 %s144, 1
        %s298 = scalar_lea.sflag [#allocation5], %s297
        %s299 = sand.u32 %s144, 1
        %s300 = smul.addr %s299, 256
        %s301 = scalar_lea.vmem [#allocation9], %s300
        %s302 = smul.u32 2, %s29
        %s303 = smul.u32 2, %s29
        %s304 = smul.u32 32, %s30
        %s305 = smul.u32 32, %s29
        %s306 = smul.u32 %s30, 256
        %v307 = vld [vmem:[%s249] sm:$0x3]
        %v308 = vld [vmem:[%s258] sm:$0x3]
        %v309 = vlaneseq
        %v310 = vand.u32 %v309, 127
        %v311 = vadd.s32 %v310, 128
        %s312 = sld [smem:[#allocation2]]
        %v313 = vlaneseq
        %v314 = vshrl.u32 %v313, 7
        %v315 = vsub.s32 0, %v314
        %v316 = vrot.slane %v307, %v315
        %v317 = vlaneseq
        %v318 = vshrl.u32 %v317, 7
        %v319 = vsub.s32 1, %v318
        %v320 = vrot.slane %v307, %v319
        %v321 = vlaneseq
        %v322 = vshrl.u32 %v321, 7
        %v323 = vsub.s32 0, %v322
        %v324 = vrot.slane %v316, %v323
        %326 = vbcast.lane.b32.xlu0 %v324, 256
        %v327 = vpop.permute.xlu0 %326
        %s329 = sor.u32 256, 8
        %330 = vbcast.lane.b32.xlu0 %v324, %s329
        %v331 = vpop.permute.xlu0 %330
        %s333 = sor.u32 256, 16
        %334 = vbcast.lane.b32.xlu0 %v324, %s333
        %v335 = vpop.permute.xlu0 %334
        %s337 = sor.u32 256, 24
        %338 = vbcast.lane.b32.xlu0 %v324, %s337
        %v339 = vpop.permute.xlu0 %338
        %s341 = sor.u32 256, 32
        %342 = vbcast.lane.b32.xlu0 %v324, %s341
        %v343 = vpop.permute.xlu0 %342
        %s345 = sor.u32 256, 40
        %346 = vbcast.lane.b32.xlu0 %v324, %s345
        %v347 = vpop.permute.xlu0 %346
        %s349 = sor.u32 256, 48
        %350 = vbcast.lane.b32.xlu0 %v324, %s349
        %v351 = vpop.permute.xlu0 %350
        %s353 = sor.u32 256, 56
        %354 = vbcast.lane.b32.xlu0 %v324, %s353
        %v355 = vpop.permute.xlu0 %354
        %s357 = sor.u32 256, 64
        %358 = vbcast.lane.b32.xlu0 %v324, %s357
        %v359 = vpop.permute.xlu0 %358
        %s361 = sor.u32 256, 72
        %362 = vbcast.lane.b32.xlu0 %v324, %s361
        %v363 = vpop.permute.xlu0 %362
        %s365 = sor.u32 256, 80
        %366 = vbcast.lane.b32.xlu0 %v324, %s365
        %v367 = vpop.permute.xlu0 %366
        %s369 = sor.u32 256, 88
        %370 = vbcast.lane.b32.xlu0 %v324, %s369
        %v371 = vpop.permute.xlu0 %370
        %s373 = sor.u32 256, 96
        %374 = vbcast.lane.b32.xlu0 %v324, %s373
        %v375 = vpop.permute.xlu0 %374
        %s377 = sor.u32 256, 104
        %378 = vbcast.lane.b32.xlu0 %v324, %s377
        %v379 = vpop.permute.xlu0 %378
        %s381 = sor.u32 256, 112
        %382 = vbcast.lane.b32.xlu0 %v324, %s381
        %v383 = vpop.permute.xlu0 %382
        %s385 = sor.u32 256, 120
        %386 = vbcast.lane.b32.xlu0 %v324, %s385
        %v387 = vpop.permute.xlu0 %386
        %v388 = vlaneseq
        %v389 = vshrl.u32 %v388, 7
        %v390 = vsub.s32 0, %v389
        %v391 = vrot.slane %v320, %v390
        %393 = vbcast.lane.b32.xlu0 %v391, 256
        %v394 = vpop.permute.xlu0 %393
        %s396 = sor.u32 256, 8
        %397 = vbcast.lane.b32.xlu0 %v391, %s396
        %v398 = vpop.permute.xlu0 %397
        %s400 = sor.u32 256, 16
        %401 = vbcast.lane.b32.xlu0 %v391, %s400
        %v402 = vpop.permute.xlu0 %401
        %s404 = sor.u32 256, 24
        %405 = vbcast.lane.b32.xlu0 %v391, %s404
        %v406 = vpop.permute.xlu0 %405
        %s408 = sor.u32 256, 32
        %409 = vbcast.lane.b32.xlu0 %v391, %s408
        %v410 = vpop.permute.xlu0 %409
        %s412 = sor.u32 256, 40
        %413 = vbcast.lane.b32.xlu0 %v391, %s412
        %v414 = vpop.permute.xlu0 %413
        %s416 = sor.u32 256, 48
        %417 = vbcast.lane.b32.xlu0 %v391, %s416
        %v418 = vpop.permute.xlu0 %417
        %s420 = sor.u32 256, 56
        %421 = vbcast.lane.b32.xlu0 %v391, %s420
        %v422 = vpop.permute.xlu0 %421
        %s424 = sor.u32 256, 64
        %425 = vbcast.lane.b32.xlu0 %v391, %s424
        %v426 = vpop.permute.xlu0 %425
        %s428 = sor.u32 256, 72
        %429 = vbcast.lane.b32.xlu0 %v391, %s428
        %v430 = vpop.permute.xlu0 %429
        %s432 = sor.u32 256, 80
        %433 = vbcast.lane.b32.xlu0 %v391, %s432
        %v434 = vpop.permute.xlu0 %433
        %s436 = sor.u32 256, 88
        %437 = vbcast.lane.b32.xlu0 %v391, %s436
        %v438 = vpop.permute.xlu0 %437
        %s440 = sor.u32 256, 96
        %441 = vbcast.lane.b32.xlu0 %v391, %s440
        %v442 = vpop.permute.xlu0 %441
        %s444 = sor.u32 256, 104
        %445 = vbcast.lane.b32.xlu0 %v391, %s444
        %v446 = vpop.permute.xlu0 %445
        %s448 = sor.u32 256, 112
        %449 = vbcast.lane.b32.xlu0 %v391, %s448
        %v450 = vpop.permute.xlu0 %449
        %s452 = sor.u32 256, 120
        %453 = vbcast.lane.b32.xlu0 %v391, %s452
        %v454 = vpop.permute.xlu0 %453
        %v455 = vstv %s306
        %v456 = vsub.s32 %v327, %v455
        %v457 = vsub.s32 %v331, %v455
        %v458 = vsub.s32 %v335, %v455
        %v459 = vsub.s32 %v339, %v455
        %v460 = vsub.s32 %v343, %v455
        %v461 = vsub.s32 %v347, %v455
        %v462 = vsub.s32 %v351, %v455
        %v463 = vsub.s32 %v355, %v455
        %v464 = vsub.s32 %v359, %v455
        %v465 = vsub.s32 %v363, %v455
        %v466 = vsub.s32 %v367, %v455
        %v467 = vsub.s32 %v371, %v455
        %v468 = vsub.s32 %v375, %v455
        %v469 = vsub.s32 %v379, %v455
        %v470 = vsub.s32 %v383, %v455
        %v471 = vsub.s32 %v387, %v455
        %v472 = vsub.s32 %v394, %v455
        %v473 = vsub.s32 %v398, %v455
        %v474 = vsub.s32 %v402, %v455
        %v475 = vsub.s32 %v406, %v455
        %v476 = vsub.s32 %v410, %v455
        %v477 = vsub.s32 %v414, %v455
        %v478 = vsub.s32 %v418, %v455
        %v479 = vsub.s32 %v422, %v455
        %v480 = vsub.s32 %v426, %v455
        %v481 = vsub.s32 %v430, %v455
        %v482 = vsub.s32 %v434, %v455
        %v483 = vsub.s32 %v438, %v455
        %v484 = vsub.s32 %v442, %v455
        %v485 = vsub.s32 %v446, %v455
        %v486 = vsub.s32 %v450, %v455
        %v487 = vsub.s32 %v454, %v455
        %vm488 = vcmp.eq.s32.totalorder %v456, %v310
        %vm489 = vcmp.eq.s32.totalorder %v456, %v311
        %vm490 = vcmp.eq.s32.totalorder %v457, %v310
        %vm491 = vcmp.eq.s32.totalorder %v457, %v311
        %vm492 = vcmp.eq.s32.totalorder %v458, %v310
        %vm493 = vcmp.eq.s32.totalorder %v458, %v311
        %vm494 = vcmp.eq.s32.totalorder %v459, %v310
        %vm495 = vcmp.eq.s32.totalorder %v459, %v311
        %vm496 = vcmp.eq.s32.totalorder %v460, %v310
        %vm497 = vcmp.eq.s32.totalorder %v460, %v311
        %vm498 = vcmp.eq.s32.totalorder %v461, %v310
        %vm499 = vcmp.eq.s32.totalorder %v461, %v311
        %vm500 = vcmp.eq.s32.totalorder %v462, %v310
        %vm501 = vcmp.eq.s32.totalorder %v462, %v311
        %vm502 = vcmp.eq.s32.totalorder %v463, %v310
        %vm503 = vcmp.eq.s32.totalorder %v463, %v311
        %vm504 = vcmp.eq.s32.totalorder %v464, %v310
        %vm505 = vcmp.eq.s32.totalorder %v464, %v311
        %vm506 = vcmp.eq.s32.totalorder %v465, %v310
        %vm507 = vcmp.eq.s32.totalorder %v465, %v311
        %vm508 = vcmp.eq.s32.totalorder %v466, %v310
        %vm509 = vcmp.eq.s32.totalorder %v466, %v311
        %vm510 = vcmp.eq.s32.totalorder %v467, %v310
        %vm511 = vcmp.eq.s32.totalorder %v467, %v311
        %vm512 = vcmp.eq.s32.totalorder %v468, %v310
        %vm513 = vcmp.eq.s32.totalorder %v468, %v311
        %vm514 = vcmp.eq.s32.totalorder %v469, %v310
        %vm515 = vcmp.eq.s32.totalorder %v469, %v311
        %vm516 = vcmp.eq.s32.totalorder %v470, %v310
        %vm517 = vcmp.eq.s32.totalorder %v470, %v311
        %vm518 = vcmp.eq.s32.totalorder %v471, %v310
        %vm519 = vcmp.eq.s32.totalorder %v471, %v311
        %vm520 = vcmp.eq.s32.totalorder %v472, %v310
        %vm521 = vcmp.eq.s32.totalorder %v472, %v311
        %vm522 = vcmp.eq.s32.totalorder %v473, %v310
        %vm523 = vcmp.eq.s32.totalorder %v473, %v311
        %vm524 = vcmp.eq.s32.totalorder %v474, %v310
        %vm525 = vcmp.eq.s32.totalorder %v474, %v311
        %vm526 = vcmp.eq.s32.totalorder %v475, %v310
        %vm527 = vcmp.eq.s32.totalorder %v475, %v311
        %vm528 = vcmp.eq.s32.totalorder %v476, %v310
        %vm529 = vcmp.eq.s32.totalorder %v476, %v311
        %vm530 = vcmp.eq.s32.totalorder %v477, %v310
        %vm531 = vcmp.eq.s32.totalorder %v477, %v311
        %vm532 = vcmp.eq.s32.totalorder %v478, %v310
        %vm533 = vcmp.eq.s32.totalorder %v478, %v311
        %vm534 = vcmp.eq.s32.totalorder %v479, %v310
        %vm535 = vcmp.eq.s32.totalorder %v479, %v311
        %vm536 = vcmp.eq.s32.totalorder %v480, %v310
        %vm537 = vcmp.eq.s32.totalorder %v480, %v311
        %vm538 = vcmp.eq.s32.totalorder %v481, %v310
        %vm539 = vcmp.eq.s32.totalorder %v481, %v311
        %vm540 = vcmp.eq.s32.totalorder %v482, %v310
        %vm541 = vcmp.eq.s32.totalorder %v482, %v311
        %vm542 = vcmp.eq.s32.totalorder %v483, %v310
        %vm543 = vcmp.eq.s32.totalorder %v483, %v311
        %vm544 = vcmp.eq.s32.totalorder %v484, %v310
        %vm545 = vcmp.eq.s32.totalorder %v484, %v311
        %vm546 = vcmp.eq.s32.totalorder %v485, %v310
        %vm547 = vcmp.eq.s32.totalorder %v485, %v311
        %vm548 = vcmp.eq.s32.totalorder %v486, %v310
        %vm549 = vcmp.eq.s32.totalorder %v486, %v311
        %vm550 = vcmp.eq.s32.totalorder %v487, %v310
        %vm551 = vcmp.eq.s32.totalorder %v487, %v311
        %v552 = vsel %vm488, 1, 0
        %v553 = vsel %vm489, 1, 0
        %v554 = vsel %vm490, 1, 0
        %v555 = vsel %vm491, 1, 0
        %v556 = vsel %vm492, 1, 0
        %v557 = vsel %vm493, 1, 0
        %v558 = vsel %vm494, 1, 0
        %v559 = vsel %vm495, 1, 0
        %v560 = vsel %vm496, 1, 0
        %v561 = vsel %vm497, 1, 0
        %v562 = vsel %vm498, 1, 0
        %v563 = vsel %vm499, 1, 0
        %v564 = vsel %vm500, 1, 0
        %v565 = vsel %vm501, 1, 0
        %v566 = vsel %vm502, 1, 0
        %v567 = vsel %vm503, 1, 0
        %v568 = vsel %vm504, 1, 0
        %v569 = vsel %vm505, 1, 0
        %v570 = vsel %vm506, 1, 0
        %v571 = vsel %vm507, 1, 0
        %v572 = vsel %vm508, 1, 0
        %v573 = vsel %vm509, 1, 0
        %v574 = vsel %vm510, 1, 0
        %v575 = vsel %vm511, 1, 0
        %v576 = vsel %vm512, 1, 0
        %v577 = vsel %vm513, 1, 0
        %v578 = vsel %vm514, 1, 0
        %v579 = vsel %vm515, 1, 0
        %v580 = vsel %vm516, 1, 0
        %v581 = vsel %vm517, 1, 0
        %v582 = vsel %vm518, 1, 0
        %v583 = vsel %vm519, 1, 0
        %v584 = vsel %vm520, 1, 0
        %v585 = vsel %vm521, 1, 0
        %v586 = vsel %vm522, 1, 0
        %v587 = vsel %vm523, 1, 0
        %v588 = vsel %vm524, 1, 0
        %v589 = vsel %vm525, 1, 0
        %v590 = vsel %vm526, 1, 0
        %v591 = vsel %vm527, 1, 0
        %v592 = vsel %vm528, 1, 0
        %v593 = vsel %vm529, 1, 0
        %v594 = vsel %vm530, 1, 0
        %v595 = vsel %vm531, 1, 0
        %v596 = vsel %vm532, 1, 0
        %v597 = vsel %vm533, 1, 0
        %v598 = vsel %vm534, 1, 0
        %v599 = vsel %vm535, 1, 0
        %v600 = vsel %vm536, 1, 0
        %v601 = vsel %vm537, 1, 0
        %v602 = vsel %vm538, 1, 0
        %v603 = vsel %vm539, 1, 0
        %v604 = vsel %vm540, 1, 0
        %v605 = vsel %vm541, 1, 0
        %v606 = vsel %vm542, 1, 0
        %v607 = vsel %vm543, 1, 0
        %v608 = vsel %vm544, 1, 0
        %v609 = vsel %vm545, 1, 0
        %v610 = vsel %vm546, 1, 0
        %v611 = vsel %vm547, 1, 0
        %v612 = vsel %vm548, 1, 0
        %v613 = vsel %vm549, 1, 0
        %v614 = vsel %vm550, 1, 0
        %v615 = vsel %vm551, 1, 0
        %v616 = vcvt.s32.f32 %v552
        %v617 = vcvt.s32.f32 %v553
        %v618 = vcvt.s32.f32 %v554
        %v619 = vcvt.s32.f32 %v555
        %v620 = vcvt.s32.f32 %v556
        %v621 = vcvt.s32.f32 %v557
        %v622 = vcvt.s32.f32 %v558
        %v623 = vcvt.s32.f32 %v559
        %v624 = vcvt.s32.f32 %v560
        %v625 = vcvt.s32.f32 %v561
        %v626 = vcvt.s32.f32 %v562
        %v627 = vcvt.s32.f32 %v563
        %v628 = vcvt.s32.f32 %v564
        %v629 = vcvt.s32.f32 %v565
        %v630 = vcvt.s32.f32 %v566
        %v631 = vcvt.s32.f32 %v567
        %v632 = vcvt.s32.f32 %v568
        %v633 = vcvt.s32.f32 %v569
        %v634 = vcvt.s32.f32 %v570
        %v635 = vcvt.s32.f32 %v571
        %v636 = vcvt.s32.f32 %v572
        %v637 = vcvt.s32.f32 %v573
        %v638 = vcvt.s32.f32 %v574
        %v639 = vcvt.s32.f32 %v575
        %v640 = vcvt.s32.f32 %v576
        %v641 = vcvt.s32.f32 %v577
        %v642 = vcvt.s32.f32 %v578
        %v643 = vcvt.s32.f32 %v579
        %v644 = vcvt.s32.f32 %v580
        %v645 = vcvt.s32.f32 %v581
        %v646 = vcvt.s32.f32 %v582
        %v647 = vcvt.s32.f32 %v583
        %v648 = vcvt.s32.f32 %v584
        %v649 = vcvt.s32.f32 %v585
        %v650 = vcvt.s32.f32 %v586
        %v651 = vcvt.s32.f32 %v587
        %v652 = vcvt.s32.f32 %v588
        %v653 = vcvt.s32.f32 %v589
        %v654 = vcvt.s32.f32 %v590
        %v655 = vcvt.s32.f32 %v591
        %v656 = vcvt.s32.f32 %v592
        %v657 = vcvt.s32.f32 %v593
        %v658 = vcvt.s32.f32 %v594
        %v659 = vcvt.s32.f32 %v595
        %v660 = vcvt.s32.f32 %v596
        %v661 = vcvt.s32.f32 %v597
        %v662 = vcvt.s32.f32 %v598
        %v663 = vcvt.s32.f32 %v599
        %v664 = vcvt.s32.f32 %v600
        %v665 = vcvt.s32.f32 %v601
        %v666 = vcvt.s32.f32 %v602
        %v667 = vcvt.s32.f32 %v603
        %v668 = vcvt.s32.f32 %v604
        %v669 = vcvt.s32.f32 %v605
        %v670 = vcvt.s32.f32 %v606
        %v671 = vcvt.s32.f32 %v607
        %v672 = vcvt.s32.f32 %v608
        %v673 = vcvt.s32.f32 %v609
        %v674 = vcvt.s32.f32 %v610
        %v675 = vcvt.s32.f32 %v611
        %v676 = vcvt.s32.f32 %v612
        %v677 = vcvt.s32.f32 %v613
        %v678 = vcvt.s32.f32 %v614
        %v679 = vcvt.s32.f32 %v615
        %v680 = vstv %s312
        %v681 = vmul.f32 %v616, %v680
        %v682 = vmul.f32 %v617, %v680
        %v683 = vmul.f32 %v618, %v680
        %v684 = vmul.f32 %v619, %v680
        %v685 = vmul.f32 %v620, %v680
        %v686 = vmul.f32 %v621, %v680
        %v687 = vmul.f32 %v622, %v680
        %v688 = vmul.f32 %v623, %v680
        %v689 = vmul.f32 %v624, %v680
        %v690 = vmul.f32 %v625, %v680
        %v691 = vmul.f32 %v626, %v680
        %v692 = vmul.f32 %v627, %v680
        %v693 = vmul.f32 %v628, %v680
        %v694 = vmul.f32 %v629, %v680
        %v695 = vmul.f32 %v630, %v680
        %v696 = vmul.f32 %v631, %v680
        %v697 = vmul.f32 %v632, %v680
        %v698 = vmul.f32 %v633, %v680
        %v699 = vmul.f32 %v634, %v680
        %v700 = vmul.f32 %v635, %v680
        %v701 = vmul.f32 %v636, %v680
        %v702 = vmul.f32 %v637, %v680
        %v703 = vmul.f32 %v638, %v680
        %v704 = vmul.f32 %v639, %v680
        %v705 = vmul.f32 %v640, %v680
        %v706 = vmul.f32 %v641, %v680
        %v707 = vmul.f32 %v642, %v680
        %v708 = vmul.f32 %v643, %v680
        %v709 = vmul.f32 %v644, %v680
        %v710 = vmul.f32 %v645, %v680
        %v711 = vmul.f32 %v646, %v680
        %v712 = vmul.f32 %v647, %v680
        %v713 = vmul.f32 %v648, %v680
        %v714 = vmul.f32 %v649, %v680
        %v715 = vmul.f32 %v650, %v680
        %v716 = vmul.f32 %v651, %v680
        %v717 = vmul.f32 %v652, %v680
        %v718 = vmul.f32 %v653, %v680
        %v719 = vmul.f32 %v654, %v680
        %v720 = vmul.f32 %v655, %v680
        %v721 = vmul.f32 %v656, %v680
        %v722 = vmul.f32 %v657, %v680
        %v723 = vmul.f32 %v658, %v680
        %v724 = vmul.f32 %v659, %v680
        %v725 = vmul.f32 %v660, %v680
        %v726 = vmul.f32 %v661, %v680
        %v727 = vmul.f32 %v662, %v680
        %v728 = vmul.f32 %v663, %v680
        %v729 = vmul.f32 %v664, %v680
        %v730 = vmul.f32 %v665, %v680
        %v731 = vmul.f32 %v666, %v680
        %v732 = vmul.f32 %v667, %v680
        %v733 = vmul.f32 %v668, %v680
        %v734 = vmul.f32 %v669, %v680
        %v735 = vmul.f32 %v670, %v680
        %v736 = vmul.f32 %v671, %v680
        %v737 = vmul.f32 %v672, %v680
        %v738 = vmul.f32 %v673, %v680
        %v739 = vmul.f32 %v674, %v680
        %v740 = vmul.f32 %v675, %v680
        %v741 = vmul.f32 %v676, %v680
        %v742 = vmul.f32 %v677, %v680
        %v743 = vmul.f32 %v678, %v680
        %v744 = vmul.f32 %v679, %v680
        %v745 = vlaneseq
        %v746 = vshrl.u32 %v745, 7
        %v747 = vsub.s32 0, %v746
        %v748 = vrot.slane %v308, %v747
        %v749 = vlaneseq
        %v750 = vshrl.u32 %v749, 7
        %v751 = vsub.s32 1, %v750
        %v752 = vrot.slane %v308, %v751
        %v753 = vlaneseq
        %v754 = vshrl.u32 %v753, 7
        %v755 = vsub.s32 0, %v754
        %v756 = vrot.slane %v748, %v755
        %758 = vbcast.lane.b32.xlu0 %v756, 256
        %v759 = vpop.permute.xlu0 %758
        %s761 = sor.u32 256, 8
        %762 = vbcast.lane.b32.xlu0 %v756, %s761
        %v763 = vpop.permute.xlu0 %762
        %s765 = sor.u32 256, 16
        %766 = vbcast.lane.b32.xlu0 %v756, %s765
        %v767 = vpop.permute.xlu0 %766
        %s769 = sor.u32 256, 24
        %770 = vbcast.lane.b32.xlu0 %v756, %s769
        %v771 = vpop.permute.xlu0 %770
        %s773 = sor.u32 256, 32
        %774 = vbcast.lane.b32.xlu0 %v756, %s773
        %v775 = vpop.permute.xlu0 %774
        %s777 = sor.u32 256, 40
        %778 = vbcast.lane.b32.xlu0 %v756, %s777
        %v779 = vpop.permute.xlu0 %778
        %s781 = sor.u32 256, 48
        %782 = vbcast.lane.b32.xlu0 %v756, %s781
        %v783 = vpop.permute.xlu0 %782
        %s785 = sor.u32 256, 56
        %786 = vbcast.lane.b32.xlu0 %v756, %s785
        %v787 = vpop.permute.xlu0 %786
        %s789 = sor.u32 256, 64
        %790 = vbcast.lane.b32.xlu0 %v756, %s789
        %v791 = vpop.permute.xlu0 %790
        %s793 = sor.u32 256, 72
        %794 = vbcast.lane.b32.xlu0 %v756, %s793
        %v795 = vpop.permute.xlu0 %794
        %s797 = sor.u32 256, 80
        %798 = vbcast.lane.b32.xlu0 %v756, %s797
        %v799 = vpop.permute.xlu0 %798
        %s801 = sor.u32 256, 88
        %802 = vbcast.lane.b32.xlu0 %v756, %s801
        %v803 = vpop.permute.xlu0 %802
        %s805 = sor.u32 256, 96
        %806 = vbcast.lane.b32.xlu0 %v756, %s805
        %v807 = vpop.permute.xlu0 %806
        %s809 = sor.u32 256, 104
        %810 = vbcast.lane.b32.xlu0 %v756, %s809
        %v811 = vpop.permute.xlu0 %810
        %s813 = sor.u32 256, 112
        %814 = vbcast.lane.b32.xlu0 %v756, %s813
        %v815 = vpop.permute.xlu0 %814
        %s817 = sor.u32 256, 120
        %818 = vbcast.lane.b32.xlu0 %v756, %s817
        %v819 = vpop.permute.xlu0 %818
        %v820 = vlaneseq
        %v821 = vshrl.u32 %v820, 7
        %v822 = vsub.s32 0, %v821
        %v823 = vrot.slane %v752, %v822
        %825 = vbcast.lane.b32.xlu0 %v823, 256
        %v826 = vpop.permute.xlu0 %825
        %s828 = sor.u32 256, 8
        %829 = vbcast.lane.b32.xlu0 %v823, %s828
        %v830 = vpop.permute.xlu0 %829
        %s832 = sor.u32 256, 16
        %833 = vbcast.lane.b32.xlu0 %v823, %s832
        %v834 = vpop.permute.xlu0 %833
        %s836 = sor.u32 256, 24
        %837 = vbcast.lane.b32.xlu0 %v823, %s836
        %v838 = vpop.permute.xlu0 %837
        %s840 = sor.u32 256, 32
        %841 = vbcast.lane.b32.xlu0 %v823, %s840
        %v842 = vpop.permute.xlu0 %841
        %s844 = sor.u32 256, 40
        %845 = vbcast.lane.b32.xlu0 %v823, %s844
        %v846 = vpop.permute.xlu0 %845
        %s848 = sor.u32 256, 48
        %849 = vbcast.lane.b32.xlu0 %v823, %s848
        %v850 = vpop.permute.xlu0 %849
        %s852 = sor.u32 256, 56
        %853 = vbcast.lane.b32.xlu0 %v823, %s852
        %v854 = vpop.permute.xlu0 %853
        %s856 = sor.u32 256, 64
        %857 = vbcast.lane.b32.xlu0 %v823, %s856
        %v858 = vpop.permute.xlu0 %857
        %s860 = sor.u32 256, 72
        %861 = vbcast.lane.b32.xlu0 %v823, %s860
        %v862 = vpop.permute.xlu0 %861
        %s864 = sor.u32 256, 80
        %865 = vbcast.lane.b32.xlu0 %v823, %s864
        %v866 = vpop.permute.xlu0 %865
        %s868 = sor.u32 256, 88
        %869 = vbcast.lane.b32.xlu0 %v823, %s868
        %v870 = vpop.permute.xlu0 %869
        %s872 = sor.u32 256, 96
        %873 = vbcast.lane.b32.xlu0 %v823, %s872
        %v874 = vpop.permute.xlu0 %873
        %s876 = sor.u32 256, 104
        %877 = vbcast.lane.b32.xlu0 %v823, %s876
        %v878 = vpop.permute.xlu0 %877
        %s880 = sor.u32 256, 112
        %881 = vbcast.lane.b32.xlu0 %v823, %s880
        %v882 = vpop.permute.xlu0 %881
        %s884 = sor.u32 256, 120
        %885 = vbcast.lane.b32.xlu0 %v823, %s884
        %v886 = vpop.permute.xlu0 %885
        %v887 = vsub.s32 %v759, %v455
        %v888 = vsub.s32 %v763, %v455
        %v889 = vsub.s32 %v767, %v455
        %v890 = vsub.s32 %v771, %v455
        %v891 = vsub.s32 %v775, %v455
        %v892 = vsub.s32 %v779, %v455
        %v893 = vsub.s32 %v783, %v455
        %v894 = vsub.s32 %v787, %v455
        %v895 = vsub.s32 %v791, %v455
        %v896 = vsub.s32 %v795, %v455
        %v897 = vsub.s32 %v799, %v455
        %v898 = vsub.s32 %v803, %v455
        %v899 = vsub.s32 %v807, %v455
        %v900 = vsub.s32 %v811, %v455
        %v901 = vsub.s32 %v815, %v455
        %v902 = vsub.s32 %v819, %v455
        %v903 = vsub.s32 %v826, %v455
        %v904 = vsub.s32 %v830, %v455
        %v905 = vsub.s32 %v834, %v455
        %v906 = vsub.s32 %v838, %v455
        %v907 = vsub.s32 %v842, %v455
        %v908 = vsub.s32 %v846, %v455
        %v909 = vsub.s32 %v850, %v455
        %v910 = vsub.s32 %v854, %v455
        %v911 = vsub.s32 %v858, %v455
        %v912 = vsub.s32 %v862, %v455
        %v913 = vsub.s32 %v866, %v455
        %v914 = vsub.s32 %v870, %v455
        %v915 = vsub.s32 %v874, %v455
        %v916 = vsub.s32 %v878, %v455
        %v917 = vsub.s32 %v882, %v455
        %v918 = vsub.s32 %v886, %v455
        %vm919 = vcmp.eq.s32.totalorder %v887, %v310
        %vm920 = vcmp.eq.s32.totalorder %v887, %v311
        %vm921 = vcmp.eq.s32.totalorder %v888, %v310
        %vm922 = vcmp.eq.s32.totalorder %v888, %v311
        %vm923 = vcmp.eq.s32.totalorder %v889, %v310
        %vm924 = vcmp.eq.s32.totalorder %v889, %v311
        %vm925 = vcmp.eq.s32.totalorder %v890, %v310
        %vm926 = vcmp.eq.s32.totalorder %v890, %v311
        %vm927 = vcmp.eq.s32.totalorder %v891, %v310
        %vm928 = vcmp.eq.s32.totalorder %v891, %v311
        %vm929 = vcmp.eq.s32.totalorder %v892, %v310
        %vm930 = vcmp.eq.s32.totalorder %v892, %v311
        %vm931 = vcmp.eq.s32.totalorder %v893, %v310
        %vm932 = vcmp.eq.s32.totalorder %v893, %v311
        %vm933 = vcmp.eq.s32.totalorder %v894, %v310
        %vm934 = vcmp.eq.s32.totalorder %v894, %v311
        %vm935 = vcmp.eq.s32.totalorder %v895, %v310
        %vm936 = vcmp.eq.s32.totalorder %v895, %v311
        %vm937 = vcmp.eq.s32.totalorder %v896, %v310
        %vm938 = vcmp.eq.s32.totalorder %v896, %v311
        %vm939 = vcmp.eq.s32.totalorder %v897, %v310
        %vm940 = vcmp.eq.s32.totalorder %v897, %v311
        %vm941 = vcmp.eq.s32.totalorder %v898, %v310
        %vm942 = vcmp.eq.s32.totalorder %v898, %v311
        %vm943 = vcmp.eq.s32.totalorder %v899, %v310
        %vm944 = vcmp.eq.s32.totalorder %v899, %v311
        %vm945 = vcmp.eq.s32.totalorder %v900, %v310
        %vm946 = vcmp.eq.s32.totalorder %v900, %v311
        %vm947 = vcmp.eq.s32.totalorder %v901, %v310
        %vm948 = vcmp.eq.s32.totalorder %v901, %v311
        %vm949 = vcmp.eq.s32.totalorder %v902, %v310
        %vm950 = vcmp.eq.s32.totalorder %v902, %v311
        %vm951 = vcmp.eq.s32.totalorder %v903, %v310
        %vm952 = vcmp.eq.s32.totalorder %v903, %v311
        %vm953 = vcmp.eq.s32.totalorder %v904, %v310
        %vm954 = vcmp.eq.s32.totalorder %v904, %v311
        %vm955 = vcmp.eq.s32.totalorder %v905, %v310
        %vm956 = vcmp.eq.s32.totalorder %v905, %v311
        %vm957 = vcmp.eq.s32.totalorder %v906, %v310
        %vm958 = vcmp.eq.s32.totalorder %v906, %v311
        %vm959 = vcmp.eq.s32.totalorder %v907, %v310
        %vm960 = vcmp.eq.s32.totalorder %v907, %v311
        %vm961 = vcmp.eq.s32.totalorder %v908, %v310
        %vm962 = vcmp.eq.s32.totalorder %v908, %v311
        %vm963 = vcmp.eq.s32.totalorder %v909, %v310
        %vm964 = vcmp.eq.s32.totalorder %v909, %v311
        %vm965 = vcmp.eq.s32.totalorder %v910, %v310
        %vm966 = vcmp.eq.s32.totalorder %v910, %v311
        %vm967 = vcmp.eq.s32.totalorder %v911, %v310
        %vm968 = vcmp.eq.s32.totalorder %v911, %v311
        %vm969 = vcmp.eq.s32.totalorder %v912, %v310
        %vm970 = vcmp.eq.s32.totalorder %v912, %v311
        %vm971 = vcmp.eq.s32.totalorder %v913, %v310
        %vm972 = vcmp.eq.s32.totalorder %v913, %v311
        %vm973 = vcmp.eq.s32.totalorder %v914, %v310
        %vm974 = vcmp.eq.s32.totalorder %v914, %v311
        %vm975 = vcmp.eq.s32.totalorder %v915, %v310
        %vm976 = vcmp.eq.s32.totalorder %v915, %v311
        %vm977 = vcmp.eq.s32.totalorder %v916, %v310
        %vm978 = vcmp.eq.s32.totalorder %v916, %v311
        %vm979 = vcmp.eq.s32.totalorder %v917, %v310
        %vm980 = vcmp.eq.s32.totalorder %v917, %v311
        %vm981 = vcmp.eq.s32.totalorder %v918, %v310
        %vm982 = vcmp.eq.s32.totalorder %v918, %v311
        %v983 = vsel %vm919, 1, 0
        %v984 = vsel %vm920, 1, 0
        %v985 = vsel %vm921, 1, 0
        %v986 = vsel %vm922, 1, 0
        %v987 = vsel %vm923, 1, 0
        %v988 = vsel %vm924, 1, 0
        %v989 = vsel %vm925, 1, 0
        %v990 = vsel %vm926, 1, 0
        %v991 = vsel %vm927, 1, 0
        %v992 = vsel %vm928, 1, 0
        %v993 = vsel %vm929, 1, 0
        %v994 = vsel %vm930, 1, 0
        %v995 = vsel %vm931, 1, 0
        %v996 = vsel %vm932, 1, 0
        %v997 = vsel %vm933, 1, 0
        %v998 = vsel %vm934, 1, 0
        %v999 = vsel %vm935, 1, 0
        %v1000 = vsel %vm936, 1, 0
        %v1001 = vsel %vm937, 1, 0
        %v1002 = vsel %vm938, 1, 0
        %v1003 = vsel %vm939, 1, 0
        %v1004 = vsel %vm940, 1, 0
        %v1005 = vsel %vm941, 1, 0
        %v1006 = vsel %vm942, 1, 0
        %v1007 = vsel %vm943, 1, 0
        %v1008 = vsel %vm944, 1, 0
        %v1009 = vsel %vm945, 1, 0
        %v1010 = vsel %vm946, 1, 0
        %v1011 = vsel %vm947, 1, 0
        %v1012 = vsel %vm948, 1, 0
        %v1013 = vsel %vm949, 1, 0
        %v1014 = vsel %vm950, 1, 0
        %v1015 = vsel %vm951, 1, 0
        %v1016 = vsel %vm952, 1, 0
        %v1017 = vsel %vm953, 1, 0
        %v1018 = vsel %vm954, 1, 0
        %v1019 = vsel %vm955, 1, 0
        %v1020 = vsel %vm956, 1, 0
        %v1021 = vsel %vm957, 1, 0
        %v1022 = vsel %vm958, 1, 0
        %v1023 = vsel %vm959, 1, 0
        %v1024 = vsel %vm960, 1, 0
        %v1025 = vsel %vm961, 1, 0
        %v1026 = vsel %vm962, 1, 0
        %v1027 = vsel %vm963, 1, 0
        %v1028 = vsel %vm964, 1, 0
        %v1029 = vsel %vm965, 1, 0
        %v1030 = vsel %vm966, 1, 0
        %v1031 = vsel %vm967, 1, 0
        %v1032 = vsel %vm968, 1, 0
        %v1033 = vsel %vm969, 1, 0
        %v1034 = vsel %vm970, 1, 0
        %v1035 = vsel %vm971, 1, 0
        %v1036 = vsel %vm972, 1, 0
        %v1037 = vsel %vm973, 1, 0
        %v1038 = vsel %vm974, 1, 0
        %v1039 = vsel %vm975, 1, 0
        %v1040 = vsel %vm976, 1, 0
        %v1041 = vsel %vm977, 1, 0
        %v1042 = vsel %vm978, 1, 0
        %v1043 = vsel %vm979, 1, 0
        %v1044 = vsel %vm980, 1, 0
        %v1045 = vsel %vm981, 1, 0
        %v1046 = vsel %vm982, 1, 0
        %v1047 = vcvt.s32.f32 %v983
        %v1048 = vcvt.s32.f32 %v984
        %v1049 = vcvt.s32.f32 %v985
        %v1050 = vcvt.s32.f32 %v986
        %v1051 = vcvt.s32.f32 %v987
        %v1052 = vcvt.s32.f32 %v988
        %v1053 = vcvt.s32.f32 %v989
        %v1054 = vcvt.s32.f32 %v990
        %v1055 = vcvt.s32.f32 %v991
        %v1056 = vcvt.s32.f32 %v992
        %v1057 = vcvt.s32.f32 %v993
        %v1058 = vcvt.s32.f32 %v994
        %v1059 = vcvt.s32.f32 %v995
        %v1060 = vcvt.s32.f32 %v996
        %v1061 = vcvt.s32.f32 %v997
        %v1062 = vcvt.s32.f32 %v998
        %v1063 = vcvt.s32.f32 %v999
        %v1064 = vcvt.s32.f32 %v1000
        %v1065 = vcvt.s32.f32 %v1001
        %v1066 = vcvt.s32.f32 %v1002
        %v1067 = vcvt.s32.f32 %v1003
        %v1068 = vcvt.s32.f32 %v1004
        %v1069 = vcvt.s32.f32 %v1005
        %v1070 = vcvt.s32.f32 %v1006
        %v1071 = vcvt.s32.f32 %v1007
        %v1072 = vcvt.s32.f32 %v1008
        %v1073 = vcvt.s32.f32 %v1009
        %v1074 = vcvt.s32.f32 %v1010
        %v1075 = vcvt.s32.f32 %v1011
        %v1076 = vcvt.s32.f32 %v1012
        %v1077 = vcvt.s32.f32 %v1013
        %v1078 = vcvt.s32.f32 %v1014
        %v1079 = vcvt.s32.f32 %v1015
        %v1080 = vcvt.s32.f32 %v1016
        %v1081 = vcvt.s32.f32 %v1017
        %v1082 = vcvt.s32.f32 %v1018
        %v1083 = vcvt.s32.f32 %v1019
        %v1084 = vcvt.s32.f32 %v1020
        %v1085 = vcvt.s32.f32 %v1021
        %v1086 = vcvt.s32.f32 %v1022
        %v1087 = vcvt.s32.f32 %v1023
        %v1088 = vcvt.s32.f32 %v1024
        %v1089 = vcvt.s32.f32 %v1025
        %v1090 = vcvt.s32.f32 %v1026
        %v1091 = vcvt.s32.f32 %v1027
        %v1092 = vcvt.s32.f32 %v1028
        %v1093 = vcvt.s32.f32 %v1029
        %v1094 = vcvt.s32.f32 %v1030
        %v1095 = vcvt.s32.f32 %v1031
        %v1096 = vcvt.s32.f32 %v1032
        %v1097 = vcvt.s32.f32 %v1033
        %v1098 = vcvt.s32.f32 %v1034
        %v1099 = vcvt.s32.f32 %v1035
        %v1100 = vcvt.s32.f32 %v1036
        %v1101 = vcvt.s32.f32 %v1037
        %v1102 = vcvt.s32.f32 %v1038
        %v1103 = vcvt.s32.f32 %v1039
        %v1104 = vcvt.s32.f32 %v1040
        %v1105 = vcvt.s32.f32 %v1041
        %v1106 = vcvt.s32.f32 %v1042
        %v1107 = vcvt.s32.f32 %v1043
        %v1108 = vcvt.s32.f32 %v1044
        %v1109 = vcvt.s32.f32 %v1045
        %v1110 = vcvt.s32.f32 %v1046
        %v1111 = vadd.f32 %v681, %v1047
        %v1112 = vadd.f32 %v682, %v1048
        %v1113 = vadd.f32 %v683, %v1049
        %v1114 = vadd.f32 %v684, %v1050
        %v1115 = vadd.f32 %v685, %v1051
        %v1116 = vadd.f32 %v686, %v1052
        %v1117 = vadd.f32 %v687, %v1053
        %v1118 = vadd.f32 %v688, %v1054
        %v1119 = vadd.f32 %v689, %v1055
        %v1120 = vadd.f32 %v690, %v1056
        %v1121 = vadd.f32 %v691, %v1057
        %v1122 = vadd.f32 %v692, %v1058
        %v1123 = vadd.f32 %v693, %v1059
        %v1124 = vadd.f32 %v694, %v1060
        %v1125 = vadd.f32 %v695, %v1061
        %v1126 = vadd.f32 %v696, %v1062
        %v1127 = vadd.f32 %v697, %v1063
        %v1128 = vadd.f32 %v698, %v1064
        %v1129 = vadd.f32 %v699, %v1065
        %v1130 = vadd.f32 %v700, %v1066
        %v1131 = vadd.f32 %v701, %v1067
        %v1132 = vadd.f32 %v702, %v1068
        %v1133 = vadd.f32 %v703, %v1069
        %v1134 = vadd.f32 %v704, %v1070
        %v1135 = vadd.f32 %v705, %v1071
        %v1136 = vadd.f32 %v706, %v1072
        %v1137 = vadd.f32 %v707, %v1073
        %v1138 = vadd.f32 %v708, %v1074
        %v1139 = vadd.f32 %v709, %v1075
        %v1140 = vadd.f32 %v710, %v1076
        %v1141 = vadd.f32 %v711, %v1077
        %v1142 = vadd.f32 %v712, %v1078
        %v1143 = vadd.f32 %v713, %v1079
        %v1144 = vadd.f32 %v714, %v1080
        %v1145 = vadd.f32 %v715, %v1081
        %v1146 = vadd.f32 %v716, %v1082
        %v1147 = vadd.f32 %v717, %v1083
        %v1148 = vadd.f32 %v718, %v1084
        %v1149 = vadd.f32 %v719, %v1085
        %v1150 = vadd.f32 %v720, %v1086
        %v1151 = vadd.f32 %v721, %v1087
        %v1152 = vadd.f32 %v722, %v1088
        %v1153 = vadd.f32 %v723, %v1089
        %v1154 = vadd.f32 %v724, %v1090
        %v1155 = vadd.f32 %v725, %v1091
        %v1156 = vadd.f32 %v726, %v1092
        %v1157 = vadd.f32 %v727, %v1093
        %v1158 = vadd.f32 %v728, %v1094
        %v1159 = vadd.f32 %v729, %v1095
        %v1160 = vadd.f32 %v730, %v1096
        %v1161 = vadd.f32 %v731, %v1097
        %v1162 = vadd.f32 %v732, %v1098
        %v1163 = vadd.f32 %v733, %v1099
        %v1164 = vadd.f32 %v734, %v1100
        %v1165 = vadd.f32 %v735, %v1101
        %v1166 = vadd.f32 %v736, %v1102
        %v1167 = vadd.f32 %v737, %v1103
        %v1168 = vadd.f32 %v738, %v1104
        %v1169 = vadd.f32 %v739, %v1105
        %v1170 = vadd.f32 %v740, %v1106
        %v1171 = vadd.f32 %v741, %v1107
        %v1172 = vadd.f32 %v742, %v1108
        %v1173 = vadd.f32 %v743, %v1109
        %v1174 = vadd.f32 %v744, %v1110
        %v1175 = vld [vmem:[%s267] sm:$0xff]
        %v1176 = vld [vmem:[%s267 + $0x8] sm:$0xff]
        %v1177 = vld [vmem:[%s267 + $0x10] sm:$0xff]
        %v1178 = vld [vmem:[%s267 + $0x18] sm:$0xff]
        %v1179 = vld [vmem:[%s267 + $0x20] sm:$0xff]
        %v1180 = vld [vmem:[%s267 + $0x28] sm:$0xff]
        %v1181 = vld [vmem:[%s267 + $0x30] sm:$0xff]
        %v1182 = vld [vmem:[%s267 + $0x38] sm:$0xff]
        %v1183 = vld [vmem:[%s267 + $0x40] sm:$0xff]
        %v1184 = vld [vmem:[%s267 + $0x48] sm:$0xff]
        %v1185 = vld [vmem:[%s267 + $0x50] sm:$0xff]
        %v1186 = vld [vmem:[%s267 + $0x58] sm:$0xff]
        %v1187 = vld [vmem:[%s267 + $0x60] sm:$0xff]
        %v1188 = vld [vmem:[%s267 + $0x68] sm:$0xff]
        %v1189 = vld [vmem:[%s267 + $0x70] sm:$0xff]
        %v1190 = vld [vmem:[%s267 + $0x78] sm:$0xff]
        %v1191 = vld [vmem:[%s267 + $0x80] sm:$0xff]
        %v1192 = vld [vmem:[%s267 + $0x88] sm:$0xff]
        %v1193 = vld [vmem:[%s267 + $0x90] sm:$0xff]
        %v1194 = vld [vmem:[%s267 + $0x98] sm:$0xff]
        %v1195 = vld [vmem:[%s267 + $0xa0] sm:$0xff]
        %v1196 = vld [vmem:[%s267 + $0xa8] sm:$0xff]
        %v1197 = vld [vmem:[%s267 + $0xb0] sm:$0xff]
        %v1198 = vld [vmem:[%s267 + $0xb8] sm:$0xff]
        %v1199 = vld [vmem:[%s267 + $0xc0] sm:$0xff]
        %v1200 = vld [vmem:[%s267 + $0xc8] sm:$0xff]
        %v1201 = vld [vmem:[%s267 + $0xd0] sm:$0xff]
        %v1202 = vld [vmem:[%s267 + $0xd8] sm:$0xff]
        %v1203 = vld [vmem:[%s267 + $0xe0] sm:$0xff]
        %v1204 = vld [vmem:[%s267 + $0xe8] sm:$0xff]
        %v1205 = vld [vmem:[%s267 + $0xf0] sm:$0xff]
        %v1206 = vld [vmem:[%s267 + $0xf8] sm:$0xff]
        %1207 = vmatprep.subr.mxu0 0.0
        %1208 = vmatpush1.msra.mxu0 %v1175
        %1209 = vmatprep.subr.mxu0 0.0
        %1210 = vmatpush1.msra.mxu0 %v1176
        %1211 = vmatprep.subr.mxu0 0.0
        %1212 = vmatpush1.msra.mxu0 %v1177
        %1213 = vmatprep.subr.mxu0 0.0
        %1214 = vmatpush1.msra.mxu0 %v1178
        %1215 = vmatprep.subr.mxu0 0.0
        %1216 = vmatpush1.msra.mxu0 %v1179
        %1217 = vmatprep.subr.mxu0 0.0
        %1218 = vmatpush1.msra.mxu0 %v1180
        %1219 = vmatprep.subr.mxu0 0.0
        %1220 = vmatpush1.msra.mxu0 %v1181
        %1221 = vmatprep.subr.mxu0 0.0
        %1222 = vmatpush1.msra.mxu0 %v1182
        %1223 = vmatprep.subr.mxu0 0.0
        %1224 = vmatpush1.msra.mxu0 %v1183
        %1225 = vmatprep.subr.mxu0 0.0
        %1226 = vmatpush1.msra.mxu0 %v1184
        %1227 = vmatprep.subr.mxu0 0.0
        %1228 = vmatpush1.msra.mxu0 %v1185
        %1229 = vmatprep.subr.mxu0 0.0
        %1230 = vmatpush1.msra.mxu0 %v1186
        %1231 = vmatprep.subr.mxu0 0.0
        %1232 = vmatpush1.msra.mxu0 %v1187
        %1233 = vmatprep.subr.mxu0 0.0
        %1234 = vmatpush1.msra.mxu0 %v1188
        %1235 = vmatprep.subr.mxu0 0.0
        %1236 = vmatpush1.msra.mxu0 %v1189
        %1237 = vmatprep.subr.mxu0 0.0
        %1238 = vmatpush1.msra.mxu0 %v1190
        %1239 = vmatprep.subr.mxu0 0.0
        %1240 = vmatpush1.msra.mxu0 %v1191
        %1241 = vmatprep.subr.mxu0 0.0
        %1242 = vmatpush1.msra.mxu0 %v1192
        %1243 = vmatprep.subr.mxu0 0.0
        %1244 = vmatpush1.msra.mxu0 %v1193
        %1245 = vmatprep.subr.mxu0 0.0
        %1246 = vmatpush1.msra.mxu0 %v1194
        %1247 = vmatprep.subr.mxu0 0.0
        %1248 = vmatpush1.msra.mxu0 %v1195
        %1249 = vmatprep.subr.mxu0 0.0
        %1250 = vmatpush1.msra.mxu0 %v1196
        %1251 = vmatprep.subr.mxu0 0.0
        %1252 = vmatpush1.msra.mxu0 %v1197
        %1253 = vmatprep.subr.mxu0 0.0
        %1254 = vmatpush1.msra.mxu0 %v1198
        %1255 = vmatprep.subr.mxu0 0.0
        %1256 = vmatpush1.msra.mxu0 %v1199
        %1257 = vmatprep.subr.mxu0 0.0
        %1258 = vmatpush1.msra.mxu0 %v1200
        %1259 = vmatprep.subr.mxu0 0.0
        %1260 = vmatpush1.msra.mxu0 %v1201
        %1261 = vmatprep.subr.mxu0 0.0
        %1262 = vmatpush1.msra.mxu0 %v1202
        %1263 = vmatprep.subr.mxu0 0.0
        %1264 = vmatpush1.msra.mxu0 %v1203
        %1265 = vmatprep.subr.mxu0 0.0
        %1266 = vmatpush1.msra.mxu0 %v1204
        %1267 = vmatprep.subr.mxu0 0.0
        %1268 = vmatpush1.msra.mxu0 %v1205
        %1269 = vmatprep.subr.mxu0 0.0
        %1270 = vmatpush1.msra.mxu0 %v1206
        %1271 = vmatprep.mubr.f32.mxu0 %v1112
        %1272 = vmatmul.mubr.f32.gmra.mrb[0].mxu0 %v1111
        %v1273 = vpop.f32.mrb[0].mxu0
        %v1274 = vadd.f32 0.0, %v1273
        %v1275 = vpop.f32.mrb[0].mxu0
        %1276 = vmatprep.mubr.f32.mxu0 %v1114
        %1277 = vmatmul.mubr.f32.gmra.mrb[0].mxu0 %v1113
        %v1278 = vpop.f32.mrb[0].mxu0
        %v1279 = vadd.f32 0.0, %v1278
        %v1280 = vpop.f32.mrb[0].mxu0
        %1281 = vmatprep.mubr.f32.mxu0 %v1116
        %1282 = vmatmul.mubr.f32.gmra.mrb[0].mxu0 %v1115
        %v1283 = vpop.f32.mrb[0].mxu0
        %v1284 = vadd.f32 0.0, %v1283
        %v1285 = vpop.f32.mrb[0].mxu0
        %1286 = vmatprep.mubr.f32.mxu0 %v1118
        %1287 = vmatmul.mubr.f32.gmra.mrb[0].mxu0 %v1117
        %v1288 = vpop.f32.mrb[0].mxu0
        %v1289 = vadd.f32 0.0, %v1288
        %v1290 = vpop.f32.mrb[0].mxu0
        %1291 = vmatprep.mubr.f32.mxu0 %v1120
        %1292 = vmatmul.mubr.f32.gmra.mrb[0].mxu0 %v1119
        %v1293 = vpop.f32.mrb[0].mxu0
        %v1294 = vadd.f32 0.0, %v1293
        %v1295 = vpop.f32.mrb[0].mxu0
        %1296 = vmatprep.mubr.f32.mxu0 %v1122
        %1297 = vmatmul.mubr.f32.gmra.mrb[0].mxu0 %v1121
        %v1298 = vpop.f32.mrb[0].mxu0
        %v1299 = vadd.f32 0.0, %v1298
        %v1300 = vpop.f32.mrb[0].mxu0
        %1301 = vmatprep.mubr.f32.mxu0 %v1124
        %1302 = vmatmul.mubr.f32.gmra.mrb[0].mxu0 %v1123
        %v1303 = vpop.f32.mrb[0].mxu0
        %v1304 = vadd.f32 0.0, %v1303
        %v1305 = vpop.f32.mrb[0].mxu0
        %1306 = vmatprep.mubr.f32.mxu0 %v1126
        %1307 = vmatmul.mubr.f32.gmra.mrb[0].mxu0 %v1125
        %v1308 = vpop.f32.mrb[0].mxu0
        %v1309 = vadd.f32 0.0, %v1308
        %v1310 = vpop.f32.mrb[0].mxu0
        %1311 = vmatprep.mubr.f32.mxu0 %v1128
        %1312 = vmatmul.mubr.f32.gmra.mrb[0].mxu0 %v1127
        %v1313 = vpop.f32.mrb[0].mxu0
        %v1314 = vadd.f32 0.0, %v1313
        %v1315 = vpop.f32.mrb[0].mxu0
        %1316 = vmatprep.mubr.f32.mxu0 %v1130
        %1317 = vmatmul.mubr.f32.gmra.mrb[0].mxu0 %v1129
        %v1318 = vpop.f32.mrb[0].mxu0
        %v1319 = vadd.f32 0.0, %v1318
        %v1320 = vpop.f32.mrb[0].mxu0
        %1321 = vmatprep.mubr.f32.mxu0 %v1132
        %1322 = vmatmul.mubr.f32.gmra.mrb[0].mxu0 %v1131
        %v1323 = vpop.f32.mrb[0].mxu0
        %v1324 = vadd.f32 0.0, %v1323
        %v1325 = vpop.f32.mrb[0].mxu0
        %1326 = vmatprep.mubr.f32.mxu0 %v1134
        %1327 = vmatmul.mubr.f32.gmra.mrb[0].mxu0 %v1133
        %v1328 = vpop.f32.mrb[0].mxu0
        %v1329 = vadd.f32 0.0, %v1328
        %v1330 = vpop.f32.mrb[0].mxu0
        %1331 = vmatprep.mubr.f32.mxu0 %v1136
        %1332 = vmatmul.mubr.f32.gmra.mrb[0].mxu0 %v1135
        %v1333 = vpop.f32.mrb[0].mxu0
        %v1334 = vadd.f32 0.0, %v1333
        %v1335 = vpop.f32.mrb[0].mxu0
        %1336 = vmatprep.mubr.f32.mxu0 %v1138
        %1337 = vmatmul.mubr.f32.gmra.mrb[0].mxu0 %v1137
        %v1338 = vpop.f32.mrb[0].mxu0
        %v1339 = vadd.f32 0.0, %v1338
        %v1340 = vpop.f32.mrb[0].mxu0
        %1341 = vmatprep.mubr.f32.mxu0 %v1140
        %1342 = vmatmul.mubr.f32.gmra.mrb[0].mxu0 %v1139
        %v1343 = vpop.f32.mrb[0].mxu0
        %v1344 = vadd.f32 0.0, %v1343
        %v1345 = vpop.f32.mrb[0].mxu0
        %1346 = vmatprep.mubr.f32.mxu0 %v1142
        %1347 = vmatmul.mubr.f32.gmra.mrb[0].mxu0 %v1141
        %v1348 = vpop.f32.mrb[0].mxu0
        %v1349 = vadd.f32 0.0, %v1348
        %v1350 = vpop.f32.mrb[0].mxu0
        %1351 = vmatprep.mubr.f32.mxu0 %v1144
        %1352 = vmatmul.mubr.f32.gmra.mrb[0].mxu0 %v1143
        %v1353 = vpop.f32.mrb[0].mxu0
        %v1354 = vadd.f32 0.0, %v1353
        %v1355 = vpop.f32.mrb[0].mxu0
        %1356 = vmatprep.mubr.f32.mxu0 %v1146
        %1357 = vmatmul.mubr.f32.gmra.mrb[0].mxu0 %v1145
        %v1358 = vpop.f32.mrb[0].mxu0
        %v1359 = vadd.f32 0.0, %v1358
        %v1360 = vpop.f32.mrb[0].mxu0
        %1361 = vmatprep.mubr.f32.mxu0 %v1148
        %1362 = vmatmul.mubr.f32.gmra.mrb[0].mxu0 %v1147
        %v1363 = vpop.f32.mrb[0].mxu0
        %v1364 = vadd.f32 0.0, %v1363
        %v1365 = vpop.f32.mrb[0].mxu0
        %1366 = vmatprep.mubr.f32.mxu0 %v1150
        %1367 = vmatmul.mubr.f32.gmra.mrb[0].mxu0 %v1149
        %v1368 = vpop.f32.mrb[0].mxu0
        %v1369 = vadd.f32 0.0, %v1368
        %v1370 = vpop.f32.mrb[0].mxu0
        %1371 = vmatprep.mubr.f32.mxu0 %v1152
        %1372 = vmatmul.mubr.f32.gmra.mrb[0].mxu0 %v1151
        %v1373 = vpop.f32.mrb[0].mxu0
        %v1374 = vadd.f32 0.0, %v1373
        %v1375 = vpop.f32.mrb[0].mxu0
        %1376 = vmatprep.mubr.f32.mxu0 %v1154
        %1377 = vmatmul.mubr.f32.gmra.mrb[0].mxu0 %v1153
        %v1378 = vpop.f32.mrb[0].mxu0
        %v1379 = vadd.f32 0.0, %v1378
        %v1380 = vpop.f32.mrb[0].mxu0
        %1381 = vmatprep.mubr.f32.mxu0 %v1156
        %1382 = vmatmul.mubr.f32.gmra.mrb[0].mxu0 %v1155
        %v1383 = vpop.f32.mrb[0].mxu0
        %v1384 = vadd.f32 0.0, %v1383
        %v1385 = vpop.f32.mrb[0].mxu0
        %1386 = vmatprep.mubr.f32.mxu0 %v1158
        %1387 = vmatmul.mubr.f32.gmra.mrb[0].mxu0 %v1157
        %v1388 = vpop.f32.mrb[0].mxu0
        %v1389 = vadd.f32 0.0, %v1388
        %v1390 = vpop.f32.mrb[0].mxu0
        %1391 = vmatprep.mubr.f32.mxu0 %v1160
        %1392 = vmatmul.mubr.f32.gmra.mrb[0].mxu0 %v1159
        %v1393 = vpop.f32.mrb[0].mxu0
        %v1394 = vadd.f32 0.0, %v1393
        %v1395 = vpop.f32.mrb[0].mxu0
        %1396 = vmatprep.mubr.f32.mxu0 %v1162
        %1397 = vmatmul.mubr.f32.gmra.mrb[0].mxu0 %v1161
        %v1398 = vpop.f32.mrb[0].mxu0
        %v1399 = vadd.f32 0.0, %v1398
        %v1400 = vpop.f32.mrb[0].mxu0
        %1401 = vmatprep.mubr.f32.mxu0 %v1164
        %1402 = vmatmul.mubr.f32.gmra.mrb[0].mxu0 %v1163
        %v1403 = vpop.f32.mrb[0].mxu0
        %v1404 = vadd.f32 0.0, %v1403
        %v1405 = vpop.f32.mrb[0].mxu0
        %1406 = vmatprep.mubr.f32.mxu0 %v1166
        %1407 = vmatmul.mubr.f32.gmra.mrb[0].mxu0 %v1165
        %v1408 = vpop.f32.mrb[0].mxu0
        %v1409 = vadd.f32 0.0, %v1408
        %v1410 = vpop.f32.mrb[0].mxu0
        %1411 = vmatprep.mubr.f32.mxu0 %v1168
        %1412 = vmatmul.mubr.f32.gmra.mrb[0].mxu0 %v1167
        %v1413 = vpop.f32.mrb[0].mxu0
        %v1414 = vadd.f32 0.0, %v1413
        %v1415 = vpop.f32.mrb[0].mxu0
        %1416 = vmatprep.mubr.f32.mxu0 %v1170
        %1417 = vmatmul.mubr.f32.gmra.mrb[0].mxu0 %v1169
        %v1418 = vpop.f32.mrb[0].mxu0
        %v1419 = vadd.f32 0.0, %v1418
        %v1420 = vpop.f32.mrb[0].mxu0
        %1421 = vmatprep.mubr.f32.mxu0 %v1172
        %1422 = vmatmul.mubr.f32.gmra.mrb[0].mxu0 %v1171
        %v1423 = vpop.f32.mrb[0].mxu0
        %v1424 = vadd.f32 0.0, %v1423
        %v1425 = vpop.f32.mrb[0].mxu0
        %1426 = vmatprep.mubr.f32.mxu0 %v1174
        %1427 = vmatmul.mubr.f32.gmra.mrb[0].mxu0 %v1173
        %v1428 = vpop.f32.mrb[0].mxu0
        %v1429 = vadd.f32 0.0, %v1428
        %v1430 = vpop.f32.mrb[0].mxu0
        %1431 = vdwg.mxu0
        %p1432 = scmp.eq.s32.totalorder %s30, 0
        // Predicated region
        $region49: #{tpu_custom_call.1} parent=35 // pred_check
          %p1433 = pneg %p1432
        $region50: #{tpu_custom_call.1} parent=35 // pred_check_branch
          %1435 = sbr.rel (%p1433) target = $region52
        $region51: #{tpu_custom_call.1} parent=35 // pred_region
          %1436 = vst [vmem:[%s301] sm:$0xff] %v1274
          %1437 = vst [vmem:[%s301 + $0x8] sm:$0xff] %v1279
          %1438 = vst [vmem:[%s301 + $0x10] sm:$0xff] %v1284
          %1439 = vst [vmem:[%s301 + $0x18] sm:$0xff] %v1289
          %1440 = vst [vmem:[%s301 + $0x20] sm:$0xff] %v1294
          %1441 = vst [vmem:[%s301 + $0x28] sm:$0xff] %v1299
          %1442 = vst [vmem:[%s301 + $0x30] sm:$0xff] %v1304
          %1443 = vst [vmem:[%s301 + $0x38] sm:$0xff] %v1309
          %1444 = vst [vmem:[%s301 + $0x40] sm:$0xff] %v1314
          %1445 = vst [vmem:[%s301 + $0x48] sm:$0xff] %v1319
          %1446 = vst [vmem:[%s301 + $0x50] sm:$0xff] %v1324
          %1447 = vst [vmem:[%s301 + $0x58] sm:$0xff] %v1329
          %1448 = vst [vmem:[%s301 + $0x60] sm:$0xff] %v1334
          %1449 = vst [vmem:[%s301 + $0x68] sm:$0xff] %v1339
          %1450 = vst [vmem:[%s301 + $0x70] sm:$0xff] %v1344
          %1451 = vst [vmem:[%s301 + $0x78] sm:$0xff] %v1349
          %1452 = vst [vmem:[%s301 + $0x80] sm:$0xff] %v1354
          %1453 = vst [vmem:[%s301 + $0x88] sm:$0xff] %v1359
          %1454 = vst [vmem:[%s301 + $0x90] sm:$0xff] %v1364
          %1455 = vst [vmem:[%s301 + $0x98] sm:$0xff] %v1369
          %1456 = vst [vmem:[%s301 + $0xa0] sm:$0xff] %v1374
          %1457 = vst [vmem:[%s301 + $0xa8] sm:$0xff] %v1379
          %1458 = vst [vmem:[%s301 + $0xb0] sm:$0xff] %v1384
          %1459 = vst [vmem:[%s301 + $0xb8] sm:$0xff] %v1389
          %1460 = vst [vmem:[%s301 + $0xc0] sm:$0xff] %v1394
          %1461 = vst [vmem:[%s301 + $0xc8] sm:$0xff] %v1399
          %1462 = vst [vmem:[%s301 + $0xd0] sm:$0xff] %v1404
          %1463 = vst [vmem:[%s301 + $0xd8] sm:$0xff] %v1409
          %1464 = vst [vmem:[%s301 + $0xe0] sm:$0xff] %v1414
          %1465 = vst [vmem:[%s301 + $0xe8] sm:$0xff] %v1419
          %1466 = vst [vmem:[%s301 + $0xf0] sm:$0xff] %v1424
          %1467 = vst [vmem:[%s301 + $0xf8] sm:$0xff] %v1429
        $region52: #{tpu_custom_call.1} parent=35 // pred_fallthru
          _
        %p1468 = scmp.gt.s32.totalorder %s30, 0
        // Predicated region
        $region53: #{tpu_custom_call.1} parent=35 // pred_check
          %p1469 = pneg %p1468
        $region54: #{tpu_custom_call.1} parent=35 // pred_check_branch
          %1471 = sbr.rel (%p1469) target = $region56
        $region55: #{tpu_custom_call.1} parent=35 // pred_region
          %v1472 = vld [vmem:[%s301] sm:$0xff]
          %v1473 = vld [vmem:[%s301 + $0x8] sm:$0xff]
          %v1474 = vld [vmem:[%s301 + $0x10] sm:$0xff]
          %v1475 = vld [vmem:[%s301 + $0x18] sm:$0xff]
          %v1476 = vld [vmem:[%s301 + $0x20] sm:$0xff]
          %v1477 = vld [vmem:[%s301 + $0x28] sm:$0xff]
          %v1478 = vld [vmem:[%s301 + $0x30] sm:$0xff]
          %v1479 = vld [vmem:[%s301 + $0x38] sm:$0xff]
          %v1480 = vld [vmem:[%s301 + $0x40] sm:$0xff]
          %v1481 = vld [vmem:[%s301 + $0x48] sm:$0xff]
          %v1482 = vld [vmem:[%s301 + $0x50] sm:$0xff]
          %v1483 = vld [vmem:[%s301 + $0x58] sm:$0xff]
          %v1484 = vld [vmem:[%s301 + $0x60] sm:$0xff]
          %v1485 = vld [vmem:[%s301 + $0x68] sm:$0xff]
          %v1486 = vld [vmem:[%s301 + $0x70] sm:$0xff]
          %v1487 = vld [vmem:[%s301 + $0x78] sm:$0xff]
          %v1488 = vld [vmem:[%s301 + $0x80] sm:$0xff]
          %v1489 = vld [vmem:[%s301 + $0x88] sm:$0xff]
          %v1490 = vld [vmem:[%s301 + $0x90] sm:$0xff]
          %v1491 = vld [vmem:[%s301 + $0x98] sm:$0xff]
          %v1492 = vld [vmem:[%s301 + $0xa0] sm:$0xff]
          %v1493 = vld [vmem:[%s301 + $0xa8] sm:$0xff]
          %v1494 = vld [vmem:[%s301 + $0xb0] sm:$0xff]
          %v1495 = vld [vmem:[%s301 + $0xb8] sm:$0xff]
          %v1496 = vld [vmem:[%s301 + $0xc0] sm:$0xff]
          %v1497 = vld [vmem:[%s301 + $0xc8] sm:$0xff]
          %v1498 = vld [vmem:[%s301 + $0xd0] sm:$0xff]
          %v1499 = vld [vmem:[%s301 + $0xd8] sm:$0xff]
          %v1500 = vld [vmem:[%s301 + $0xe0] sm:$0xff]
          %v1501 = vld [vmem:[%s301 + $0xe8] sm:$0xff]
          %v1502 = vld [vmem:[%s301 + $0xf0] sm:$0xff]
          %v1503 = vld [vmem:[%s301 + $0xf8] sm:$0xff]
          %v1504 = vadd.f32 %v1472, %v1274
          %v1505 = vadd.f32 %v1473, %v1279
          %v1506 = vadd.f32 %v1474, %v1284
          %v1507 = vadd.f32 %v1475, %v1289
          %v1508 = vadd.f32 %v1476, %v1294
          %v1509 = vadd.f32 %v1477, %v1299
          %v1510 = vadd.f32 %v1478, %v1304
          %v1511 = vadd.f32 %v1479, %v1309
          %v1512 = vadd.f32 %v1480, %v1314
          %v1513 = vadd.f32 %v1481, %v1319
          %v1514 = vadd.f32 %v1482, %v1324
          %v1515 = vadd.f32 %v1483, %v1329
          %v1516 = vadd.f32 %v1484, %v1334
          %v1517 = vadd.f32 %v1485, %v1339
          %v1518 = vadd.f32 %v1486, %v1344
          %v1519 = vadd.f32 %v1487, %v1349
          %v1520 = vadd.f32 %v1488, %v1354
          %v1521 = vadd.f32 %v1489, %v1359
          %v1522 = vadd.f32 %v1490, %v1364
          %v1523 = vadd.f32 %v1491, %v1369
          %v1524 = vadd.f32 %v1492, %v1374
          %v1525 = vadd.f32 %v1493, %v1379
          %v1526 = vadd.f32 %v1494, %v1384
          %v1527 = vadd.f32 %v1495, %v1389
          %v1528 = vadd.f32 %v1496, %v1394
          %v1529 = vadd.f32 %v1497, %v1399
          %v1530 = vadd.f32 %v1498, %v1404
          %v1531 = vadd.f32 %v1499, %v1409
          %v1532 = vadd.f32 %v1500, %v1414
          %v1533 = vadd.f32 %v1501, %v1419
          %v1534 = vadd.f32 %v1502, %v1424
          %v1535 = vadd.f32 %v1503, %v1429
          %1536 = vst [vmem:[%s301] sm:$0xff] %v1504
          %1537 = vst [vmem:[%s301 + $0x8] sm:$0xff] %v1505
          %1538 = vst [vmem:[%s301 + $0x10] sm:$0xff] %v1506
          %1539 = vst [vmem:[%s301 + $0x18] sm:$0xff] %v1507
          %1540 = vst [vmem:[%s301 + $0x20] sm:$0xff] %v1508
          %1541 = vst [vmem:[%s301 + $0x28] sm:$0xff] %v1509
          %1542 = vst [vmem:[%s301 + $0x30] sm:$0xff] %v1510
          %1543 = vst [vmem:[%s301 + $0x38] sm:$0xff] %v1511
          %1544 = vst [vmem:[%s301 + $0x40] sm:$0xff] %v1512
          %1545 = vst [vmem:[%s301 + $0x48] sm:$0xff] %v1513
          %1546 = vst [vmem:[%s301 + $0x50] sm:$0xff] %v1514
          %1547 = vst [vmem:[%s301 + $0x58] sm:$0xff] %v1515
          %1548 = vst [vmem:[%s301 + $0x60] sm:$0xff] %v1516
          %1549 = vst [vmem:[%s301 + $0x68] sm:$0xff] %v1517
          %1550 = vst [vmem:[%s301 + $0x70] sm:$0xff] %v1518
          %1551 = vst [vmem:[%s301 + $0x78] sm:$0xff] %v1519
          %1552 = vst [vmem:[%s301 + $0x80] sm:$0xff] %v1520
          %1553 = vst [vmem:[%s301 + $0x88] sm:$0xff] %v1521
          %1554 = vst [vmem:[%s301 + $0x90] sm:$0xff] %v1522
          %1555 = vst [vmem:[%s301 + $0x98] sm:$0xff] %v1523
          %1556 = vst [vmem:[%s301 + $0xa0] sm:$0xff] %v1524
          %1557 = vst [vmem:[%s301 + $0xa8] sm:$0xff] %v1525
          %1558 = vst [vmem:[%s301 + $0xb0] sm:$0xff] %v1526
          %1559 = vst [vmem:[%s301 + $0xb8] sm:$0xff] %v1527
          %1560 = vst [vmem:[%s301 + $0xc0] sm:$0xff] %v1528
          %1561 = vst [vmem:[%s301 + $0xc8] sm:$0xff] %v1529
          %1562 = vst [vmem:[%s301 + $0xd0] sm:$0xff] %v1530
          %1563 = vst [vmem:[%s301 + $0xd8] sm:$0xff] %v1531
          %1564 = vst [vmem:[%s301 + $0xe0] sm:$0xff] %v1532
          %1565 = vst [vmem:[%s301 + $0xe8] sm:$0xff] %v1533
          %1566 = vst [vmem:[%s301 + $0xf0] sm:$0xff] %v1534
          %1567 = vst [vmem:[%s301 + $0xf8] sm:$0xff] %v1535
        $region56: #{tpu_custom_call.1} parent=35 // pred_fallthru
          _
        %s1568 = sand.u32 %s144, 1
        %s1569 = scalar_lea.sflag [#allocation5], %s1568
        %s1570 = sand.u32 %s144, 1
        %s1571 = smul.addr %s1570, 256
        %s1572 = scalar_lea.vmem [#allocation9], %s1571
        // Predicated region
        $region57: #{tpu_custom_call.1} parent=35 // pred_check
          %p1573 = pneg %p154
        $region58: #{tpu_custom_call.1} parent=35 // pred_check_branch
          %1575 = sbr.rel (%p1573) target = $region60
        $region59: #{tpu_custom_call.1} parent=35 // pred_region
          %s1576 = smul.u32 32, %s29
          %s1578 = ssub.s32 4096, 4096
          %1579 = vsyncadd %s1569, %s1578
          %s1580 = smul.addr %s1576, 128
          %s1581 = scalar_lea.hbm %s4, %s1580
          %s1582 = sshll.u32 %s1572, 4
          %s1583 = int_to_ptr.vmem [resolvable:$true] %s1582
          %1588 = dma.vmem_to_hbm [thread:$0]  %s1583, 4096, %s1581, %s1569, 128, 128, 8
        $region60: #{tpu_custom_call.1} parent=35 // pred_fallthru
          _
      $region36: #{tpu_custom_call.1} parent=5 // pred_fallthru
        _
      %p1589 = scmp.le.s32.totalorder 2, %s20
      // Predicated region
      $region61: #{tpu_custom_call.1} parent=5 // pred_check
        %p1590 = pneg %p1589
      $region62: #{tpu_custom_call.1} parent=5 // pred_check_branch
        %1592 = sbr.rel (%p1590) target = $region64
      $region63: #{tpu_custom_call.1} parent=5 // pred_region
        %s1593 = ssub.s32 %s20, 2
        // Predicated region
        $region65: #{tpu_custom_call.1} parent=63 // pred_check
          %p1594 = pneg %p160
        $region66: #{tpu_custom_call.1} parent=63 // pred_check_branch
          %1596 = sbr.rel (%p1594) target = $region68
        $region67: #{tpu_custom_call.1} parent=63 // pred_region
          %s1597 = sand.u32 %s145, 1
          %s1598 = scalar_lea.sflag [#allocation5], %s1597
          %s1599 = sand.u32 %s145, 1
          %s1600 = smul.addr %s1599, 256
          %s1601 = scalar_lea.vmem [#allocation9], %s1600
          %1602 = dma.done %s1598, 4096
        $region68: #{tpu_custom_call.1} parent=63 // pred_fallthru
          _
      $region64: #{tpu_custom_call.1} parent=5 // pred_fallthru
        _
    $region6: #{tpu_custom_call.1} parent=1 // loop_footer
      %s24 = sadd.s32 1, %s20
    $region7: #{tpu_custom_call.1} parent=1 // loop_footer_branch
      %19 = sbr.rel target = $region3
    $region8: #{tpu_custom_call.1} parent=1 // loop_exit
      _
    %1603 = vsyncpa [#allocation4], 1
    %s1604 = scalar_lea.sflag [#allocation4], 1
    %1605 = vsyncpa %s1604, 1
    %1606 = vsyncpa [#allocation7], 1
    %s1607 = scalar_lea.sflag [#allocation7], 1
    %1608 = vsyncpa %s1607, 1
    %1609 = vsyncpa [#allocation5], 1
    %s1610 = scalar_lea.sflag [#allocation5], 1
    %1611 = vsyncpa %s1610, 1

</llo_original>
